<compile_context>
chip_gen: v7x
topology: tpu7x:2x2x1
jax: 0.10.0
libtpu: 0.0.40
codegen_flags: <defaults>
</compile_context>

<pallas_src>
import numpy as np

import jax
import jax.numpy as jnp
from jax.experimental import pallas as pl
from jax.experimental.pallas import tpu as pltpu


CPAD = 128   # channel lane padding inside the kernel (matmul N / lane dim)
CSUB = 8     # output-channel sublane padding (6 real channels -> 8 sublanes)


# ----------------------------- Pallas kernel -------------------------------

def _fused_skip_kernel(p_ref, w1_ref, b1_ref, a_ref, w2_ref, b2c_ref, o_ref):
    """conv1(+bias,relu) -> conv2 (4 taps, N-fused weights) -> zero-pad skip
    add -> relu -> channels-in-sublanes store, for a block of B images."""
    B, MPAD, K1 = p_ref.shape
    csub = o_ref.shape[1]

    # conv1 for the whole B-image block in ONE matmul (leading-dim collapse is
    # free).  Element-wise math stays f32 (v5e VPU has no bf16).
    patches = p_ref[...].reshape(B * MPAD, K1)                       # bf16
    x1 = jnp.maximum(
        jnp.dot(patches, w1_ref[...], preferred_element_type=jnp.float32)
        + b1_ref[...],
        0.0)                                                         # (B*MPAD, CPAD) f32

    # conv2 weight matmul: all 4 kernel taps N-fused (W2cat) and batched over
    # the image block -> one wide MXU op.
    y = jnp.dot(x1.astype(jnp.bfloat16), w2_ref[...],
                preferred_element_type=jnp.float32)                  # (B*MPAD, 4*CPAD)
    y = y.astype(jnp.bfloat16)       # 0/1 tap gathers below are exact on bf16

    b2c = b2c_ref[...]               # conv2 bias, pre-masked to valid canvas rows
    for b in range(B):               # static unroll over the image block
        lo = b * MPAD
        x1_b = x1[lo:lo + MPAD]                                      # (MPAD, CPAD)
        # A[p] is a static 0/1 gather matrix mapping x1 rows onto the zero-pad
        # canvas for kernel tap p; lane slices of y are 128-aligned (free).
        taps = [
            jnp.dot(a_ref[p], y[lo:lo + MPAD, p * CPAD:(p + 1) * CPAD],
                    preferred_element_type=jnp.float32)
            for p in range(4)
        ]
        acc = (x1_b + b2c) + ((taps[0] + taps[1]) + (taps[2] + taps[3]))
        # Final relu, then transpose (XLU, otherwise idle) so channels sit in
        # sublanes and the flattened canvas fills 128 lanes -> small,
        # lane-dense (CSUB, MPAD) store; NCHW falls out for free outside.
        o_ref[b] = jnp.transpose(jnp.maximum(acc, 0.0))[:csub, :]


# ------------------------------ JAX glue ------------------------------------

def _im2col_s2k2(x, pad):
    """im2col for kernel=2, stride=2 (non-overlapping windows over padded x).

    Returns (N, Ho*Wo, C*4) patches; column order (c, kh, kw) matches
    w.reshape(Cout, Cin*2*2).
    """
    N, C, H, W = x.shape
    xp = jnp.pad(x, ((0, 0), (0, 0), (pad, pad), (pad, pad)))
    Hp, Wp = H + 2 * pad, W + 2 * pad
    Ho, Wo = (Hp - 2) // 2 + 1, (Wp - 2) // 2 + 1
    xp = xp[:, :, :2 * Ho, :2 * Wo]
    blocks = xp.reshape(N, C, Ho, 2, Wo, 2)
    patches = blocks.transpose(0, 2, 4, 1, 3, 5).reshape(N, Ho * Wo, C * 4)
    return patches, Ho, Wo


def _build_tap_matrices(H1, W1, H2, W2, pad, mpad):
    """Static gather/scatter matrices for conv2-over-x1 + zero-pad skip.

    A[p, dst, src] = 1 iff canvas position dst=(i2*W1+j2) (i2<H2, j2<W2) reads
    x1 row src=(si*W1+sj) for kernel tap p=(kh,kw), si=2*i2+kh-pad (ditto sj).
    valid[dst] = 1 iff conv2 produces an output at that canvas position.
    Allocated at the padded canvas size `mpad` (>= H1*W1).
    """
    A = np.zeros((4, mpad, mpad), np.float32)
    valid = np.zeros((mpad, 1), np.float32)
    for i2 in range(H2):
        for j2 in range(W2):
            dst = i2 * W1 + j2
            valid[dst, 0] = 1.0
            for kh in range(2):
                for kw in range(2):
                    si = 2 * i2 + kh - pad
                    sj = 2 * j2 + kw - pad
                    if 0 <= si < H1 and 0 <= sj < W1:
                        A[kh * 2 + kw, dst, si * W1 + sj] = 1.0
    return A, valid


def skip_connection_forward(x, w1, b1, w2, b2):
    N, Cin, H, W = x.shape
    C1 = w1.shape[0]   # 6
    C2 = w2.shape[0]   # 3
    pad = 2
    K1 = Cin * 4

    patches, H1, W1 = _im2col_s2k2(x, pad)            # (N, M1, K1) f32
    M1 = H1 * W1
    MPAD = ((M1 + 127) // 128) * 128                  # canvas rows -> output lanes
    H2 = (H1 + 2 * pad - 2) // 2 + 1
    W2s = (W1 + 2 * pad - 2) // 2 + 1
    assert H2 <= H1 and W2s <= W1, "zero-pad skip needs conv2 output <= x1"
    assert C2 <= C1 <= CSUB

    # Batch blocking: B images per grid step; keep >= 2 grid steps so the
    # "parallel" axis can shard across v7x's two TensorCores.
    B = 1 if N <= 1 else max(1, min(8, N // 2))
    G = -(-N // B)
    Npad = G * B

    # Streamed operand: zero-padded (batch and canvas rows) bf16 patches.
    patches = jnp.pad(patches, ((0, Npad - N), (0, MPAD - M1), (0, 0)))
    patches = patches.astype(jnp.bfloat16)

    # conv1 operands (channels padded to CPAD lanes; padded lanes stay 0).
    w1p = jnp.zeros((K1, CPAD), jnp.bfloat16).at[:, :C1].set(
        w1.reshape(C1, K1).T.astype(jnp.bfloat16))
    b1p = jnp.zeros((1, CPAD), jnp.float32).at[0, :C1].set(b1.astype(jnp.float32))

    # conv2 weights: all four (kh, kw) taps concatenated along lanes (W2cat).
    w2cat = jnp.zeros((CPAD, 4 * CPAD), jnp.bfloat16)
    for kh in range(2):
        for kw in range(2):
            p = kh * 2 + kw
            w2cat = w2cat.at[:C1, p * CPAD:p * CPAD + C2].set(
                w2[:, :, kh, kw].T.astype(jnp.bfloat16))

    # Static 0/1 tap gather matrices + conv2 bias masked to valid canvas rows.
    A_np, valid_np = _build_tap_matrices(H1, W1, H2, W2s, pad, MPAD)
    A = jnp.asarray(A_np).astype(jnp.bfloat16)                      # (4, MPAD, MPAD)
    b2p = jnp.zeros((1, CPAD), jnp.float32).at[0, :C2].set(b2.astype(jnp.float32))
    b2c = jnp.asarray(valid_np) * b2p                               # (MPAD, CPAD) f32

    out_slab = pl.pallas_call(
        _fused_skip_kernel,
        out_shape=jax.ShapeDtypeStruct((Npad, CSUB, MPAD), jnp.float32),
        grid=(G,),
        in_specs=[
            pl.BlockSpec((B, MPAD, K1), lambda n: (n, 0, 0)),       # streamed patches
            pl.BlockSpec((K1, CPAD), lambda n: (0, 0)),             # resident operands:
            pl.BlockSpec((1, CPAD), lambda n: (0, 0)),
            pl.BlockSpec((4, MPAD, MPAD), lambda n: (0, 0, 0)),
            pl.BlockSpec((CPAD, 4 * CPAD), lambda n: (0, 0)),
            pl.BlockSpec((MPAD, CPAD), lambda n: (0, 0)),
        ],
        out_specs=pl.BlockSpec((B, CSUB, MPAD), lambda n: (n, 0, 0)),
        compiler_params=pltpu.CompilerParams(
            dimension_semantics=("parallel",)),
    )(patches, w1p, b1p, A, w2cat, b2c)

    # Channels already sit in sublanes -> NCHW is just slice + reshape.
    out = out_slab[:N, :C1, :M1].reshape(N, C1, H1, W1)
    return out


# ------------------------------ reference -----------------------------------

def _ref_conv(x, w, b, stride, pad):
    y = jax.lax.conv_general_dilated(
        x, w, (stride, stride), [(pad, pad), (pad, pad)],
        dimension_numbers=("NCHW", "OIHW", "NCHW"),
        precision=jax.lax.Precision.HIGHEST)
    return y + b[None, :, None, None]


if __name__ == "__main__":
    key = jax.random.PRNGKey(0)
    kx, kw1, kb1, kw2, kb2 = jax.random.split(key, 5)

    N, Cin, H, W = 2, 3, 16, 16
    x = jax.random.normal(kx, (N, Cin, H, W), dtype=jnp.float32)

    # Deterministic PyTorch-like init: U(-1/sqrt(fan_in), 1/sqrt(fan_in))
    fan1 = 3 * 2 * 2
    w1 = jax.random.uniform(kw1, (6, 3, 2, 2), jnp.float32, -1.0, 1.0) / jnp.sqrt(fan1)
    b1 = jax.random.uniform(kb1, (6,), jnp.float32, -1.0, 1.0) / jnp.sqrt(fan1)
    fan2 = 6 * 2 * 2
    w2 = jax.random.uniform(kw2, (3, 6, 2, 2), jnp.float32, -1.0, 1.0) / jnp.sqrt(fan2)
    b2 = jax.random.uniform(kb2, (3,), jnp.float32, -1.0, 1.0) / jnp.sqrt(fan2)

    fwd = jax.jit(skip_connection_forward)
    out = fwd(x, w1, b1, w2, b2)
    jax.block_until_ready(out)

    # Pure-JAX f32 reference (same zero-pad skip interpretation).
    x1_ref = jnp.maximum(_ref_conv(x, w1, b1, 2, 2), 0.0)
    y2_ref = _ref_conv(x1_ref, w2, b2, 2, 2)
    _, C1r, H1r, W1r = x1_ref.shape
    _, C2r, H2r, W2r = y2_ref.shape
    y2p_ref = jnp.pad(y2_ref, ((0, 0), (0, C1r - C2r), (0, H1r - H2r), (0, W1r - W2r)))
    out_ref = jnp.maximum(x1_ref + y2p_ref, 0.0)

    assert out.shape == out_ref.shape == (2, 6, 10, 10), out.shape
    # Kernel matmuls run on a bf16 datapath (bf16 operands / default MXU
    # precision, f32 accumulate) -> compare to the f32 reference at bf16-level
    # tolerance.
    assert jnp.allclose(out, out_ref, atol=5e-2, rtol=5e-2), (
        float(jnp.max(jnp.abs(out - out_ref))))

    print("KERNEL_OK")
</pallas_src>

<mosaic_0001>
module attributes {stable_mosaic.version = 11 : i64} {
  func.func @_fused_skip_kernel(%arg0: i32, %arg1: memref<1x128x12xbf16, #tpu.memory_space<vmem>>, %arg2: memref<12x128xbf16, #tpu.memory_space<vmem>>, %arg3: memref<1x128xf32, #tpu.memory_space<vmem>>, %arg4: memref<4x128x128xbf16, #tpu.memory_space<vmem>>, %arg5: memref<128x512xbf16, #tpu.memory_space<vmem>>, %arg6: memref<128x128xf32, #tpu.memory_space<vmem>>, %arg7: memref<1x8x128xf32, #tpu.memory_space<vmem>>) attributes {dimension_semantics = [#tpu.dimension_semantics<parallel>], iteration_bounds = array<i64: 2>, scalar_prefetch = 0 : i64, scratch_operands = 0 : i64, tpu.core_type = #tpu.core_type<tc>, window_params = [{transform_indices = @transform_0, window_bounds = array<i64: 1, 128, 12>}, {pipeline_mode = #tpu.pipeline_mode<synchronous>, transform_indices = @transform_1, window_bounds = array<i64: 12, 128>}, {pipeline_mode = #tpu.pipeline_mode<synchronous>, transform_indices = @transform_2, window_bounds = array<i64: 1, 128>}, {pipeline_mode = #tpu.pipeline_mode<synchronous>, transform_indices = @transform_3, window_bounds = array<i64: 4, 128, 128>}, {pipeline_mode = #tpu.pipeline_mode<synchronous>, transform_indices = @transform_4, window_bounds = array<i64: 128, 512>}, {pipeline_mode = #tpu.pipeline_mode<synchronous>, transform_indices = @transform_5, window_bounds = array<i64: 128, 128>}, {transform_indices = @transform_6, window_bounds = array<i64: 1, 8, 128>}]} {
    %c0 = arith.constant 0 : index
    %c0_0 = arith.constant 0 : index
    %c0_1 = arith.constant 0 : index
    %0 = vector.load %arg1[%c0, %c0_0, %c0_1] : memref<1x128x12xbf16, #tpu.memory_space<vmem>>, vector<1x128x12xbf16>
    %1 = vector.shape_cast %0 : vector<1x128x12xbf16> to vector<128x12xbf16>
    %c0_2 = arith.constant 0 : index
    %c0_3 = arith.constant 0 : index
    %2 = vector.load %arg2[%c0_2, %c0_3] : memref<12x128xbf16, #tpu.memory_space<vmem>>, vector<12x128xbf16>
    %cst = arith.constant dense<0.000000e+00> : vector<128x128xf32>
    %3 = tpu.matmul %1, %2, %cst {dimension_numbers = #tpu.dot_dimension_numbers<[1], [0], [0], [1], [0, 0, 1, 1], [], []>} : vector<128x12xbf16>, vector<12x128xbf16>, vector<128x128xf32> -> vector<128x128xf32>
    %c0_4 = arith.constant 0 : index
    %c0_5 = arith.constant 0 : index
    %4 = vector.load %arg3[%c0_4, %c0_5] : memref<1x128xf32, #tpu.memory_space<vmem>>, vector<1x128xf32>
    %5 = vector.broadcast %4 : vector<1x128xf32> to vector<128x128xf32>
    %6 = arith.addf %3, %5 : vector<128x128xf32>
    %cst_6 = arith.constant 0.000000e+00 : f32
    %7 = vector.broadcast %cst_6 : f32 to vector<128x128xf32>
    %8 = arith.maximumf %6, %7 : vector<128x128xf32>
    %9 = arith.truncf %8 : vector<128x128xf32> to vector<128x128xbf16>
    %c0_7 = arith.constant 0 : index
    %c0_8 = arith.constant 0 : index
    %10 = vector.load %arg5[%c0_7, %c0_8] : memref<128x512xbf16, #tpu.memory_space<vmem>>, vector<128x512xbf16>
    %cst_9 = arith.constant dense<0.000000e+00> : vector<128x512xf32>
    %11 = tpu.matmul %9, %10, %cst_9 {dimension_numbers = #tpu.dot_dimension_numbers<[1], [0], [0], [1], [0, 0, 1, 1], [], []>} : vector<128x128xbf16>, vector<128x512xbf16>, vector<128x512xf32> -> vector<128x512xf32>
    %12 = arith.truncf %11 : vector<128x512xf32> to vector<128x512xbf16>
    %c0_10 = arith.constant 0 : index
    %c0_11 = arith.constant 0 : index
    %13 = vector.load %arg6[%c0_10, %c0_11] : memref<128x128xf32, #tpu.memory_space<vmem>>, vector<128x128xf32>
    %c0_12 = arith.constant 0 : index
    %c0_13 = arith.constant 0 : index
    %c0_14 = arith.constant 0 : index
    %14 = vector.load %arg4[%c0_12, %c0_13, %c0_14] : memref<4x128x128xbf16, #tpu.memory_space<vmem>>, vector<1x128x128xbf16>
    %15 = vector.shape_cast %14 : vector<1x128x128xbf16> to vector<128x128xbf16>
    %16 = vector.extract_strided_slice %12 {offsets = [0, 0], sizes = [128, 128], strides = [1, 1]} : vector<128x512xbf16> to vector<128x128xbf16>
    %cst_15 = arith.constant dense<0.000000e+00> : vector<128x128xf32>
    %17 = tpu.matmul %15, %16, %cst_15 {dimension_numbers = #tpu.dot_dimension_numbers<[1], [0], [0], [1], [0, 0, 1, 1], [], []>} : vector<128x128xbf16>, vector<128x128xbf16>, vector<128x128xf32> -> vector<128x128xf32>
    %c1 = arith.constant 1 : index
    %c0_16 = arith.constant 0 : index
    %c0_17 = arith.constant 0 : index
    %18 = vector.load %arg4[%c1, %c0_16, %c0_17] : memref<4x128x128xbf16, #tpu.memory_space<vmem>>, vector<1x128x128xbf16>
    %19 = vector.shape_cast %18 : vector<1x128x128xbf16> to vector<128x128xbf16>
    %20 = vector.extract_strided_slice %12 {offsets = [0, 128], sizes = [128, 128], strides = [1, 1]} : vector<128x512xbf16> to vector<128x128xbf16>
    %cst_18 = arith.constant dense<0.000000e+00> : vector<128x128xf32>
    %21 = tpu.matmul %19, %20, %cst_18 {dimension_numbers = #tpu.dot_dimension_numbers<[1], [0], [0], [1], [0, 0, 1, 1], [], []>} : vector<128x128xbf16>, vector<128x128xbf16>, vector<128x128xf32> -> vector<128x128xf32>
    %c2 = arith.constant 2 : index
    %c0_19 = arith.constant 0 : index
    %c0_20 = arith.constant 0 : index
    %22 = vector.load %arg4[%c2, %c0_19, %c0_20] : memref<4x128x128xbf16, #tpu.memory_space<vmem>>, vector<1x128x128xbf16>
    %23 = vector.shape_cast %22 : vector<1x128x128xbf16> to vector<128x128xbf16>
    %24 = vector.extract_strided_slice %12 {offsets = [0, 256], sizes = [128, 128], strides = [1, 1]} : vector<128x512xbf16> to vector<128x128xbf16>
    %cst_21 = arith.constant dense<0.000000e+00> : vector<128x128xf32>
    %25 = tpu.matmul %23, %24, %cst_21 {dimension_numbers = #tpu.dot_dimension_numbers<[1], [0], [0], [1], [0, 0, 1, 1], [], []>} : vector<128x128xbf16>, vector<128x128xbf16>, vector<128x128xf32> -> vector<128x128xf32>
    %c3 = arith.constant 3 : index
    %c0_22 = arith.constant 0 : index
    %c0_23 = arith.constant 0 : index
    %26 = vector.load %arg4[%c3, %c0_22, %c0_23] : memref<4x128x128xbf16, #tpu.memory_space<vmem>>, vector<1x128x128xbf16>
    %27 = vector.shape_cast %26 : vector<1x128x128xbf16> to vector<128x128xbf16>
    %28 = vector.extract_strided_slice %12 {offsets = [0, 384], sizes = [128, 128], strides = [1, 1]} : vector<128x512xbf16> to vector<128x128xbf16>
    %cst_24 = arith.constant dense<0.000000e+00> : vector<128x128xf32>
    %29 = tpu.matmul %27, %28, %cst_24 {dimension_numbers = #tpu.dot_dimension_numbers<[1], [0], [0], [1], [0, 0, 1, 1], [], []>} : vector<128x128xbf16>, vector<128x128xbf16>, vector<128x128xf32> -> vector<128x128xf32>
    %30 = arith.addf %8, %13 : vector<128x128xf32>
    %31 = arith.addf %17, %21 : vector<128x128xf32>
    %32 = arith.addf %25, %29 : vector<128x128xf32>
    %33 = arith.addf %31, %32 : vector<128x128xf32>
    %34 = arith.addf %30, %33 : vector<128x128xf32>
    %cst_25 = arith.constant 0.000000e+00 : f32
    %35 = vector.broadcast %cst_25 : f32 to vector<128x128xf32>
    %36 = arith.maximumf %34, %35 : vector<128x128xf32>
    %37 = tpu.transpose %36, [1, 0] : vector<128x128xf32> -> vector<128x128xf32>
    %38 = vector.extract_strided_slice %37 {offsets = [0, 0], sizes = [8, 128], strides = [1, 1]} : vector<128x128xf32> to vector<8x128xf32>
    %c0_26 = arith.constant 0 : index
    %c0_27 = arith.constant 0 : index
    %c0_28 = arith.constant 0 : index
    %39 = vector.load %arg7[%c0_26, %c0_27, %c0_28] : memref<1x8x128xf32, #tpu.memory_space<vmem>>, vector<1x8x128xf32>
    %40 = vector.shape_cast %39 : vector<1x8x128xf32> to vector<8x128xf32>
    %41 = vector.shape_cast %38 : vector<8x128xf32> to vector<1x8x128xf32>
    tpu.vector_store %arg7[%c0_26, %c0_27, %c0_28], %41 {strides = array<i32>} : memref<1x8x128xf32, #tpu.memory_space<vmem>>, vector<1x8x128xf32>,
    return
  }
  func.func @transform_0(%arg0: i32) -> (i32, i32, i32) {
    %c0_i32 = arith.constant 0 : i32
    %c0_i32_0 = arith.constant 0 : i32
    %c0_i32_1 = arith.constant 0 : i32
    return %arg0, %c0_i32, %c0_i32_0 : i32, i32, i32
  }
  func.func @transform_1(%arg0: i32) -> (i32, i32) {
    %c0_i32 = arith.constant 0 : i32
    %c0_i32_0 = arith.constant 0 : i32
    %c0_i32_1 = arith.constant 0 : i32
    return %c0_i32, %c0_i32_0 : i32, i32
  }
  func.func @transform_2(%arg0: i32) -> (i32, i32) {
    %c0_i32 = arith.constant 0 : i32
    %c0_i32_0 = arith.constant 0 : i32
    %c0_i32_1 = arith.constant 0 : i32
    return %c0_i32, %c0_i32_0 : i32, i32
  }
  func.func @transform_3(%arg0: i32) -> (i32, i32, i32) {
    %c0_i32 = arith.constant 0 : i32
    %c0_i32_0 = arith.constant 0 : i32
    %c0_i32_1 = arith.constant 0 : i32
    %c0_i32_2 = arith.constant 0 : i32
    return %c0_i32, %c0_i32_0, %c0_i32_1 : i32, i32, i32
  }
  func.func @transform_4(%arg0: i32) -> (i32, i32) {
    %c0_i32 = arith.constant 0 : i32
    %c0_i32_0 = arith.constant 0 : i32
    %c0_i32_1 = arith.constant 0 : i32
    return %c0_i32, %c0_i32_0 : i32, i32
  }
  func.func @transform_5(%arg0: i32) -> (i32, i32) {
    %c0_i32 = arith.constant 0 : i32
    %c0_i32_0 = arith.constant 0 : i32
    %c0_i32_1 = arith.constant 0 : i32
    return %c0_i32, %c0_i32_0 : i32, i32
  }
  func.func @transform_6(%arg0: i32) -> (i32, i32, i32) {
    %c0_i32 = arith.constant 0 : i32
    %c0_i32_0 = arith.constant 0 : i32
    %c0_i32_1 = arith.constant 0 : i32
    return %arg0, %c0_i32, %c0_i32_0 : i32, i32, i32
  }
}

</mosaic_0001>

<llo_original>
// kernel: skip_connection_forward.1
$region0: #{skip_connection_forward.1}
  #allocation0 [shape = 'u32[]', space=smem, size = 0x4, offset = 0x4, fixed_abs, tag = 'smem constant byte address 0x4 - core index']
  #allocation1 [shape = 'u32[144,128]{1,0:T(1,128)}', space=vmem, size = 0x12000, scoped, tag = 'internal scratch']
  %s0 = inlined_call_operand.vmem [shape: bf16[2,128,12], index: 0, kind: input, shape index: {}]
  %s1 = inlined_call_operand.vmem [shape: bf16[12,128], index: 1, kind: input, shape index: {}]
  %s2 = inlined_call_operand.vmem [shape: f32[1,128], index: 2, kind: input, shape index: {}]
  %s3 = inlined_call_operand.vmem [shape: bf16[4,128,128], index: 3, kind: input, shape index: {}]
  %s4 = inlined_call_operand.vmem [shape: bf16[128,512], index: 4, kind: input, shape index: {}]
  %s5 = inlined_call_operand.vmem [shape: f32[128,128], index: 5, kind: input, shape index: {}]
  %s6 = inlined_call_operand.vmem [shape: f32[2,8,128], index: 6, kind: output, shape index: {}]
  %s7 = sld [smem:[#allocation0]]
  $region57: #{skip_connection_forward.1} parent=0
    _
  %s9 = ssub.s32 1, %s7
  %s10 = scalar_select 0, %s9, %s7
  loop: start=0, step=1, limit=4
  $region2: #{skip_connection_forward.1} parent=0 // loop_pre_header
    _
  $region3: #{skip_connection_forward.1} parent=0 // loop_header
    %s12 = sphi 0, %s16
    %p13 = scmp.ge.s32.totalorder %s12, 4
    %s22 = sphi 0, %s24
    %s25 = sphi 0, %s22
    %s26 = sphi 0, %s25
    %s42 = sphi 0, %s26
    %s46 = sphi 0, %s46
    %s48 = sphi 0, %s46
    %s49 = sphi 0, %s48
    %s63 = sphi 0, %s49
    %s67 = sphi 0, %s67
    %s69 = sphi 0, %s67
    %s70 = sphi 0, %s69
    %s84 = sphi 0, %s70
    %s88 = sphi 0, %s88
    %s90 = sphi 0, %s88
    %s91 = sphi 0, %s90
    %s105 = sphi 0, %s91
    %s109 = sphi 0, %s109
    %s111 = sphi 0, %s109
    %s112 = sphi 0, %s111
    %s126 = sphi 0, %s112
    %s130 = sphi 0, %s130
    %s132 = sphi 0, %s130
    %s133 = sphi 0, %s132
    %s147 = sphi 0, %s133
    %s153 = sphi 0, %s155
    %s156 = sphi 0, %s153
    %s157 = sphi 0, %s156
    %s173 = sphi 0, %s157
  $region4: #{skip_connection_forward.1} parent=0 // loop_header_branch
    %15 = sbr.rel (%p13) target = $region8
  $region5: #{skip_connection_forward.1} parent=0 // loop_body
    %s17 = ssub.s32 %s12, 1
    %s18 = ssub.s32 %s12, 2
    %s19 = sadd.s32 %s12, 1
    %s20 = ssub.s32 %s12, %s19
    %p21 = scmp.eq.s32.totalorder %s20, 0
    %s23 = sadd.s32 %s22, 1
    %s24 = scalar_select %p21, %s22, %s23
    %p27 = pneg %p21
    %p28 = scmp.eq.s32.totalorder %s12, 1
    %p29 = por %p27, %p28
    %p30 = scmp.ne.s32.totalorder %s22, %s25
    %p31 = scmp.eq.s32.totalorder %s12, 0
    %p32 = por %p30, %p31
    %p33 = scmp.ne.s32.totalorder %s22, %s25
    %p34 = scmp.eq.s32.totalorder %s17, 1
    %p35 = por %p33, %p34
    %p36 = scmp.ne.s32.totalorder %s25, %s26
    %p37 = scmp.eq.s32.totalorder %s17, 0
    %p38 = por %p36, %p37
    %p39 = scmp.ne.s32.totalorder %s25, %s26
    %p40 = scmp.eq.s32.totalorder %s18, 1
    %p41 = por %p39, %p40
    %p43 = scmp.ne.s32.totalorder %s26, %s42
    %p44 = scmp.eq.s32.totalorder %s18, 0
    %p45 = por %p43, %p44
    %s47 = sadd.s32 %s46, 1
    %p50 = scmp.eq.s32.totalorder %s12, 1
    %p51 = scmp.ne.s32.totalorder %s46, %s48
    %p52 = scmp.eq.s32.totalorder %s12, 0
    %p53 = por %p51, %p52
    %p54 = scmp.ne.s32.totalorder %s46, %s48
    %p55 = scmp.eq.s32.totalorder %s17, 1
    %p56 = por %p54, %p55
    %p57 = scmp.ne.s32.totalorder %s48, %s49
    %p58 = scmp.eq.s32.totalorder %s17, 0
    %p59 = por %p57, %p58
    %p60 = scmp.ne.s32.totalorder %s48, %s49
    %p61 = scmp.eq.s32.totalorder %s18, 1
    %p62 = por %p60, %p61
    %p64 = scmp.ne.s32.totalorder %s49, %s63
    %p65 = scmp.eq.s32.totalorder %s18, 0
    %p66 = por %p64, %p65
    %s68 = sadd.s32 %s67, 1
    %p71 = scmp.eq.s32.totalorder %s12, 1
    %p72 = scmp.ne.s32.totalorder %s67, %s69
    %p73 = scmp.eq.s32.totalorder %s12, 0
    %p74 = por %p72, %p73
    %p75 = scmp.ne.s32.totalorder %s67, %s69
    %p76 = scmp.eq.s32.totalorder %s17, 1
    %p77 = por %p75, %p76
    %p78 = scmp.ne.s32.totalorder %s69, %s70
    %p79 = scmp.eq.s32.totalorder %s17, 0
    %p80 = por %p78, %p79
    %p81 = scmp.ne.s32.totalorder %s69, %s70
    %p82 = scmp.eq.s32.totalorder %s18, 1
    %p83 = por %p81, %p82
    %p85 = scmp.ne.s32.totalorder %s70, %s84
    %p86 = scmp.eq.s32.totalorder %s18, 0
    %p87 = por %p85, %p86
    %s89 = sadd.s32 %s88, 1
    %p92 = scmp.eq.s32.totalorder %s12, 1
    %p93 = scmp.ne.s32.totalorder %s88, %s90
    %p94 = scmp.eq.s32.totalorder %s12, 0
    %p95 = por %p93, %p94
    %p96 = scmp.ne.s32.totalorder %s88, %s90
    %p97 = scmp.eq.s32.totalorder %s17, 1
    %p98 = por %p96, %p97
    %p99 = scmp.ne.s32.totalorder %s90, %s91
    %p100 = scmp.eq.s32.totalorder %s17, 0
    %p101 = por %p99, %p100
    %p102 = scmp.ne.s32.totalorder %s90, %s91
    %p103 = scmp.eq.s32.totalorder %s18, 1
    %p104 = por %p102, %p103
    %p106 = scmp.ne.s32.totalorder %s91, %s105
    %p107 = scmp.eq.s32.totalorder %s18, 0
    %p108 = por %p106, %p107
    %s110 = sadd.s32 %s109, 1
    %p113 = scmp.eq.s32.totalorder %s12, 1
    %p114 = scmp.ne.s32.totalorder %s109, %s111
    %p115 = scmp.eq.s32.totalorder %s12, 0
    %p116 = por %p114, %p115
    %p117 = scmp.ne.s32.totalorder %s109, %s111
    %p118 = scmp.eq.s32.totalorder %s17, 1
    %p119 = por %p117, %p118
    %p120 = scmp.ne.s32.totalorder %s111, %s112
    %p121 = scmp.eq.s32.totalorder %s17, 0
    %p122 = por %p120, %p121
    %p123 = scmp.ne.s32.totalorder %s111, %s112
    %p124 = scmp.eq.s32.totalorder %s18, 1
    %p125 = por %p123, %p124
    %p127 = scmp.ne.s32.totalorder %s112, %s126
    %p128 = scmp.eq.s32.totalorder %s18, 0
    %p129 = por %p127, %p128
    %s131 = sadd.s32 %s130, 1
    %p134 = scmp.eq.s32.totalorder %s12, 1
    %p135 = scmp.ne.s32.totalorder %s130, %s132
    %p136 = scmp.eq.s32.totalorder %s12, 0
    %p137 = por %p135, %p136
    %p138 = scmp.ne.s32.totalorder %s130, %s132
    %p139 = scmp.eq.s32.totalorder %s17, 1
    %p140 = por %p138, %p139
    %p141 = scmp.ne.s32.totalorder %s132, %s133
    %p142 = scmp.eq.s32.totalorder %s17, 0
    %p143 = por %p141, %p142
    %p144 = scmp.ne.s32.totalorder %s132, %s133
    %p145 = scmp.eq.s32.totalorder %s18, 1
    %p146 = por %p144, %p145
    %p148 = scmp.ne.s32.totalorder %s133, %s147
    %p149 = scmp.eq.s32.totalorder %s18, 0
    %p150 = por %p148, %p149
    %s151 = ssub.s32 %s12, %s19
    %p152 = scmp.eq.s32.totalorder %s151, 0
    %s154 = sadd.s32 %s153, 1
    %s155 = scalar_select %p152, %s153, %s154
    %p158 = pneg %p152
    %p159 = scmp.eq.s32.totalorder %s12, 1
    %p160 = por %p158, %p159
    %p161 = scmp.ne.s32.totalorder %s153, %s156
    %p162 = scmp.eq.s32.totalorder %s12, 0
    %p163 = por %p161, %p162
    %p164 = scmp.ne.s32.totalorder %s153, %s156
    %p165 = scmp.eq.s32.totalorder %s17, 1
    %p166 = por %p164, %p165
    %p167 = scmp.ne.s32.totalorder %s156, %s157
    %p168 = scmp.eq.s32.totalorder %s17, 0
    %p169 = por %p167, %p168
    %p170 = scmp.ne.s32.totalorder %s156, %s157
    %p171 = scmp.eq.s32.totalorder %s18, 1
    %p172 = por %p170, %p171
    %p174 = scmp.ne.s32.totalorder %s157, %s173
    %p175 = scmp.eq.s32.totalorder %s18, 0
    %p176 = por %p174, %p175
    %p177 = scmp.le.s32.totalorder 1, %s12
    %p178 = scmp.lt.s32.totalorder %s12, 3
    %p179 = pnand %p177, %p178
    %p180 = pneg %p179
    // Predicated region
    $region9: #{skip_connection_forward.1} parent=5 // pred_check
      _
    $region10: #{skip_connection_forward.1} parent=5 // pred_check_branch
      %182 = sbr.rel (%p179) target = $region12
    $region11: #{skip_connection_forward.1} parent=5 // pred_region
      %s183 = ssub.s32 %s12, 1
      // Predicated region
      $region13: #{skip_connection_forward.1} parent=11 // pred_check
        %p184 = pneg %p59
      $region14: #{skip_connection_forward.1} parent=11 // pred_check_branch
        %186 = sbr.rel (%p184) target = $region16
      $region15: #{skip_connection_forward.1} parent=11 // pred_region
        _
      $region16: #{skip_connection_forward.1} parent=11 // pred_fallthru
        _
      // Predicated region
      $region17: #{skip_connection_forward.1} parent=11 // pred_check
        %p187 = pneg %p80
      $region18: #{skip_connection_forward.1} parent=11 // pred_check_branch
        %189 = sbr.rel (%p187) target = $region20
      $region19: #{skip_connection_forward.1} parent=11 // pred_region
        _
      $region20: #{skip_connection_forward.1} parent=11 // pred_fallthru
        _
      // Predicated region
      $region21: #{skip_connection_forward.1} parent=11 // pred_check
        %p190 = pneg %p101
      $region22: #{skip_connection_forward.1} parent=11 // pred_check_branch
        %192 = sbr.rel (%p190) target = $region24
      $region23: #{skip_connection_forward.1} parent=11 // pred_region
        _
      $region24: #{skip_connection_forward.1} parent=11 // pred_fallthru
        _
      // Predicated region
      $region25: #{skip_connection_forward.1} parent=11 // pred_check
        %p193 = pneg %p122
      $region26: #{skip_connection_forward.1} parent=11 // pred_check_branch
        %195 = sbr.rel (%p193) target = $region28
      $region27: #{skip_connection_forward.1} parent=11 // pred_region
        _
      $region28: #{skip_connection_forward.1} parent=11 // pred_fallthru
        _
      // Predicated region
      $region29: #{skip_connection_forward.1} parent=11 // pred_check
        %p196 = pneg %p143
      $region30: #{skip_connection_forward.1} parent=11 // pred_check_branch
        %198 = sbr.rel (%p196) target = $region32
      $region31: #{skip_connection_forward.1} parent=11 // pred_region
        _
      $region32: #{skip_connection_forward.1} parent=11 // pred_fallthru
        _
    $region12: #{skip_connection_forward.1} parent=5 // pred_fallthru
      _
    %p199 = scmp.lt.s32.totalorder %s12, 2
    // Predicated region
    $region33: #{skip_connection_forward.1} parent=5 // pred_check
      %p200 = pneg %p199
    $region34: #{skip_connection_forward.1} parent=5 // pred_check_branch
      %202 = sbr.rel (%p200) target = $region36
    $region35: #{skip_connection_forward.1} parent=5 // pred_region
      // Predicated region
      $region37: #{skip_connection_forward.1} parent=35 // pred_check
        %p203 = pneg %p32
      $region38: #{skip_connection_forward.1} parent=35 // pred_check_branch
        %205 = sbr.rel (%p203) target = $region40
      $region39: #{skip_connection_forward.1} parent=35 // pred_region
        %p206 = scmp.lt.s32.totalorder %s12, 1
        %s207 = scalar_select %p206, %s12, 1
        %s208 = smul.addr %s207, 16
        %s209 = smul.addr %s208, 4
        %s210 = scalar_lea.vmem %s0, %s209
      $region40: #{skip_connection_forward.1} parent=35 // pred_fallthru
        _
    $region36: #{skip_connection_forward.1} parent=5 // pred_fallthru
      _
    %p211 = scmp.le.s32.totalorder 1, %s12
    %p212 = scmp.lt.s32.totalorder %s12, 3
    %p213 = pnand %p211, %p212
    %p214 = pneg %p213
    // Predicated region
    $region41: #{skip_connection_forward.1} parent=5 // pred_check
      _
    $region42: #{skip_connection_forward.1} parent=5 // pred_check_branch
      %216 = sbr.rel (%p213) target = $region44
    $region43: #{skip_connection_forward.1} parent=5 // pred_region
      %s217 = ssub.s32 %s12, 1
      %p218 = scmp.lt.s32.totalorder %s17, 1
      %s219 = scalar_select %p218, %s17, 1
      %s220 = smul.addr %s219, 16
      %s221 = smul.addr %s220, 4
      %s222 = scalar_lea.vmem %s0, %s221
      %p223 = pneg %p38
      %p224 = pneg %p35
      %p225 = pneg %p59
      %p226 = pneg %p56
      %p227 = pneg %p80
      %p228 = pneg %p77
      %p229 = pneg %p101
      %p230 = pneg %p98
      %p231 = pneg %p122
      %p232 = pneg %p119
      %p233 = pneg %p143
      %p234 = pneg %p140
      %p235 = pneg %p169
      %p236 = pneg %p166
      %p237 = scmp.lt.s32.totalorder %s17, 1
      %s238 = scalar_select %p237, %s17, 1
      %s239 = smul.addr %s238, 8
      %s240 = scalar_lea.vmem %s6, %s239
      %p241 = scmp.lt.s32.totalorder %s17, 1
      %s242 = scalar_select %p241, %s17, 1
      %s243 = smul.addr %s242, 16
      %s244 = smul.addr %s243, 4
      %s245 = scalar_lea.vmem %s0, %s244
      %p246 = scmp.lt.s32.totalorder %s17, 1
      %s247 = scalar_select %p246, %s17, 1
      %s248 = smul.addr %s247, 8
      %s249 = scalar_lea.vmem %s6, %s248
      %v251 = vld [vmem:[%s245] sm:$0xf]
      %v252 = vld [vmem:[%s245 + $0x4] sm:$0xf]
      %v253 = vld [vmem:[%s245 + $0x8] sm:$0xf]
      %v254 = vld [vmem:[%s245 + $0xc] sm:$0xf]
      %v255 = vld [vmem:[%s245 + $0x10] sm:$0xf]
      %v256 = vld [vmem:[%s245 + $0x14] sm:$0xf]
      %v257 = vld [vmem:[%s245 + $0x18] sm:$0xf]
      %v258 = vld [vmem:[%s245 + $0x1c] sm:$0xf]
      %v259 = vld [vmem:[%s245 + $0x20] sm:$0xf]
      %v260 = vld [vmem:[%s245 + $0x24] sm:$0xf]
      %v261 = vld [vmem:[%s245 + $0x28] sm:$0xf]
      %v262 = vld [vmem:[%s245 + $0x2c] sm:$0xf]
      %v263 = vld [vmem:[%s245 + $0x30] sm:$0xf]
      %v264 = vld [vmem:[%s245 + $0x34] sm:$0xf]
      %v265 = vld [vmem:[%s245 + $0x38] sm:$0xf]
      %v266 = vld [vmem:[%s245 + $0x3c] sm:$0xf]
      %v267 = vld [vmem:[%s1] sm:$0xf]
      %v268 = vld [vmem:[%s1 + $0x4] sm:$0x3]
      %v269 = vld [vmem:[%s2] sm:$0x1]
      %v271 = vlaneseq
      %v272 = vshrl.u32 %v271, 7
      %v273 = vsub.s32 0, %v272
      %v274 = vrot.slane %v269, %v273
      %v292 = vunpack.c.l.b16 %v251
      %v293 = vunpack.c.l.b16 %v252
      %v294 = vunpack.c.l.b16 %v253
      %v295 = vunpack.c.l.b16 %v254
      %v296 = vunpack.c.l.b16 %v255
      %v297 = vunpack.c.l.b16 %v256
      %v298 = vunpack.c.l.b16 %v257
      %v299 = vunpack.c.l.b16 %v258
      %v300 = vunpack.c.l.b16 %v259
      %v301 = vunpack.c.l.b16 %v260
      %v302 = vunpack.c.l.b16 %v261
      %v303 = vunpack.c.l.b16 %v262
      %v304 = vunpack.c.l.b16 %v263
      %v305 = vunpack.c.l.b16 %v264
      %v306 = vunpack.c.l.b16 %v265
      %v307 = vunpack.c.l.b16 %v266
      %v308 = vpack.c.b16 %v293, %v292
      %v309 = vpack.c.b16 %v295, %v294
      %v310 = vpack.c.b16 %v297, %v296
      %v311 = vpack.c.b16 %v299, %v298
      %v312 = vpack.c.b16 %v301, %v300
      %v313 = vpack.c.b16 %v303, %v302
      %v314 = vpack.c.b16 %v305, %v304
      %v315 = vpack.c.b16 %v307, %v306
      %v318 = vunpack.c.l.b16 %v267
      %v319 = vunpack.c.l.b16 %v268
      %v320 = vpack.c.b16 %v319, %v318
      %vm321 = vcmask 97280
      %v323 = vsel %vm321, %v308, 0
      %v326 = vsel %vm321, %v309, 0
      %v329 = vsel %vm321, %v310, 0
      %v332 = vsel %vm321, %v311, 0
      %v335 = vsel %vm321, %v312, 0
      %v338 = vsel %vm321, %v313, 0
      %v341 = vsel %vm321, %v314, 0
      %v344 = vsel %vm321, %v315, 0
      %vm346 = vcmask 1045504
      %v348 = vsel %vm346, %v320, 0
      %350 = vmatprep.subr.bf16.mxu0 0
      %351 = vmatpush1.bf16.msra.mxu0 %v348
      %352 = vmatprep.subr.bf16.mxu0 0
      %353 = vmatpush1.bf16.msra.mxu0 0
      %354 = vmatprep.subr.bf16.mxu0 0
      %355 = vmatpush1.bf16.msra.mxu0 0
      %356 = vmatprep.subr.bf16.mxu0 0
      %357 = vmatpush1.bf16.msra.mxu0 0
      %358 = vmatprep.subr.bf16.mxu0 0
      %359 = vmatpush1.bf16.msra.mxu0 0
      %360 = vmatprep.subr.bf16.mxu0 0
      %361 = vmatpush1.bf16.msra.mxu0 0
      %362 = vmatprep.subr.bf16.mxu0 0
      %363 = vmatpush1.bf16.msra.mxu0 0
      %364 = vmatprep.subr.bf16.mxu0 0
      %365 = vmatpush1.bf16.msra.mxu0 0
      %366 = vmatprep.subr.bf16.mxu0 0
      %367 = vmatpush1.bf16.msra.mxu0 0
      %368 = vmatprep.subr.bf16.mxu0 0
      %369 = vmatpush1.bf16.msra.mxu0 0
      %370 = vmatprep.subr.bf16.mxu0 0
      %371 = vmatpush1.bf16.msra.mxu0 0
      %372 = vmatprep.subr.bf16.mxu0 0
      %373 = vmatpush1.bf16.msra.mxu0 0
      %374 = vmatprep.subr.bf16.mxu0 0
      %375 = vmatpush1.bf16.msra.mxu0 0
      %376 = vmatprep.subr.bf16.mxu0 0
      %377 = vmatpush1.bf16.msra.mxu0 0
      %378 = vmatprep.subr.bf16.mxu0 0
      %379 = vmatpush1.bf16.msra.mxu0 0
      %380 = vmatprep.subr.bf16.mxu0 0
      %381 = vmatpush1.bf16.msra.mxu0 0
      %382 = vmatprep.mubr.bf16.mxu0 0
      %383 = vmatmul.mubr.bf16.gmra.mrb[0].mxu0 %v323
      %v384 = vpop.f32.mrb[0].mxu0
      %v385 = vadd.f32 %v274, %v384
      %v386 = vpop.f32.mrb[0].mxu0
      %v387 = vpop.f32.mrb[0].mxu0
      %v388 = vadd.f32 %v274, %v387
      %v389 = vpop.f32.mrb[0].mxu0
      %390 = vmatprep.mubr.bf16.mxu0 0
      %391 = vmatmul.mubr.bf16.gmra.mrb[0].mxu0 %v326
      %v392 = vpop.f32.mrb[0].mxu0
      %v393 = vadd.f32 %v274, %v392
      %v394 = vpop.f32.mrb[0].mxu0
      %v395 = vpop.f32.mrb[0].mxu0
      %v396 = vadd.f32 %v274, %v395
      %v397 = vpop.f32.mrb[0].mxu0
      %398 = vmatprep.mubr.bf16.mxu0 0
      %399 = vmatmul.mubr.bf16.gmra.mrb[0].mxu0 %v329
      %v400 = vpop.f32.mrb[0].mxu0
      %v401 = vadd.f32 %v274, %v400
      %v402 = vpop.f32.mrb[0].mxu0
      %v403 = vpop.f32.mrb[0].mxu0
      %v404 = vadd.f32 %v274, %v403
      %v405 = vpop.f32.mrb[0].mxu0
      %406 = vmatprep.mubr.bf16.mxu0 0
      %407 = vmatmul.mubr.bf16.gmra.mrb[0].mxu0 %v332
      %v408 = vpop.f32.mrb[0].mxu0
      %v409 = vadd.f32 %v274, %v408
      %v410 = vpop.f32.mrb[0].mxu0
      %v411 = vpop.f32.mrb[0].mxu0
      %v412 = vadd.f32 %v274, %v411
      %v413 = vpop.f32.mrb[0].mxu0
      %414 = vmatprep.mubr.bf16.mxu0 0
      %415 = vmatmul.mubr.bf16.gmra.mrb[0].mxu0 %v335
      %v416 = vpop.f32.mrb[0].mxu0
      %v417 = vadd.f32 %v274, %v416
      %v418 = vpop.f32.mrb[0].mxu0
      %v419 = vpop.f32.mrb[0].mxu0
      %v420 = vadd.f32 %v274, %v419
      %v421 = vpop.f32.mrb[0].mxu0
      %422 = vmatprep.mubr.bf16.mxu0 0
      %423 = vmatmul.mubr.bf16.gmra.mrb[0].mxu0 %v338
      %v424 = vpop.f32.mrb[0].mxu0
      %v425 = vadd.f32 %v274, %v424
      %v426 = vpop.f32.mrb[0].mxu0
      %v427 = vpop.f32.mrb[0].mxu0
      %v428 = vadd.f32 %v274, %v427
      %v429 = vpop.f32.mrb[0].mxu0
      %430 = vmatprep.mubr.bf16.mxu0 0
      %431 = vmatmul.mubr.bf16.gmra.mrb[0].mxu0 %v341
      %v432 = vpop.f32.mrb[0].mxu0
      %v433 = vadd.f32 %v274, %v432
      %v434 = vpop.f32.mrb[0].mxu0
      %v435 = vpop.f32.mrb[0].mxu0
      %v436 = vadd.f32 %v274, %v435
      %v437 = vpop.f32.mrb[0].mxu0
      %438 = vmatprep.mubr.bf16.mxu0 0
      %439 = vmatmul.mubr.bf16.gmra.mrb[0].mxu0 %v344
      %v440 = vpop.f32.mrb[0].mxu0
      %v441 = vadd.f32 %v274, %v440
      %v442 = vpop.f32.mrb[0].mxu0
      %v443 = vpop.f32.mrb[0].mxu0
      %v444 = vadd.f32 %v274, %v443
      %v445 = vpop.f32.mrb[0].mxu0
      %446 = vdwg.mxu0
      %v447 = vmax.f32 %v385, 0.0
      %v448 = vmax.f32 %v388, 0.0
      %v449 = vmax.f32 %v393, 0.0
      %v450 = vmax.f32 %v396, 0.0
      %v451 = vmax.f32 %v401, 0.0
      %v452 = vmax.f32 %v404, 0.0
      %v453 = vmax.f32 %v409, 0.0
      %v454 = vmax.f32 %v412, 0.0
      %v455 = vmax.f32 %v417, 0.0
      %v456 = vmax.f32 %v420, 0.0
      %v457 = vmax.f32 %v425, 0.0
      %v458 = vmax.f32 %v428, 0.0
      %v459 = vmax.f32 %v433, 0.0
      %v460 = vmax.f32 %v436, 0.0
      %v461 = vmax.f32 %v441, 0.0
      %v462 = vmax.f32 %v444, 0.0
      %v463 = vpack.c.bf16 %v448, %v447
      %v464 = vpack.c.bf16 %v450, %v449
      %v465 = vpack.c.bf16 %v452, %v451
      %v466 = vpack.c.bf16 %v454, %v453
      %v467 = vpack.c.bf16 %v456, %v455
      %v468 = vpack.c.bf16 %v458, %v457
      %v469 = vpack.c.bf16 %v460, %v459
      %v470 = vpack.c.bf16 %v462, %v461
      %v471 = vld [vmem:[%s4] sm:$0xff]
      %v472 = vld [vmem:[%s4 + $0x8] sm:$0xff]
      %v473 = vld [vmem:[%s4 + $0x10] sm:$0xff]
      %v474 = vld [vmem:[%s4 + $0x18] sm:$0xff]
      %v475 = vld [vmem:[%s4 + $0x20] sm:$0xff]
      %v476 = vld [vmem:[%s4 + $0x28] sm:$0xff]
      %v477 = vld [vmem:[%s4 + $0x30] sm:$0xff]
      %v478 = vld [vmem:[%s4 + $0x38] sm:$0xff]
      %v479 = vld [vmem:[%s4 + $0x40] sm:$0xff]
      %v480 = vld [vmem:[%s4 + $0x48] sm:$0xff]
      %v481 = vld [vmem:[%s4 + $0x50] sm:$0xff]
      %v482 = vld [vmem:[%s4 + $0x58] sm:$0xff]
      %v483 = vld [vmem:[%s4 + $0x60] sm:$0xff]
      %v484 = vld [vmem:[%s4 + $0x68] sm:$0xff]
      %v485 = vld [vmem:[%s4 + $0x70] sm:$0xff]
      %v486 = vld [vmem:[%s4 + $0x78] sm:$0xff]
      %v487 = vld [vmem:[%s4 + $0x80] sm:$0xff]
      %v488 = vld [vmem:[%s4 + $0x88] sm:$0xff]
      %v489 = vld [vmem:[%s4 + $0x90] sm:$0xff]
      %v490 = vld [vmem:[%s4 + $0x98] sm:$0xff]
      %v491 = vld [vmem:[%s4 + $0xa0] sm:$0xff]
      %v492 = vld [vmem:[%s4 + $0xa8] sm:$0xff]
      %v493 = vld [vmem:[%s4 + $0xb0] sm:$0xff]
      %v494 = vld [vmem:[%s4 + $0xb8] sm:$0xff]
      %v495 = vld [vmem:[%s4 + $0xc0] sm:$0xff]
      %v496 = vld [vmem:[%s4 + $0xc8] sm:$0xff]
      %v497 = vld [vmem:[%s4 + $0xd0] sm:$0xff]
      %v498 = vld [vmem:[%s4 + $0xd8] sm:$0xff]
      %v499 = vld [vmem:[%s4 + $0xe0] sm:$0xff]
      %v500 = vld [vmem:[%s4 + $0xe8] sm:$0xff]
      %v501 = vld [vmem:[%s4 + $0xf0] sm:$0xff]
      %v502 = vld [vmem:[%s4 + $0xf8] sm:$0xff]
      %v535 = vunpack.c.l.b16 %v471
      %v536 = vunpack.c.h.b16 %v471
      %v537 = vunpack.c.l.b16 %v472
      %v538 = vunpack.c.h.b16 %v472
      %v539 = vunpack.c.l.b16 %v473
      %v540 = vunpack.c.h.b16 %v473
      %v541 = vunpack.c.l.b16 %v474
      %v542 = vunpack.c.h.b16 %v474
      %v543 = vunpack.c.l.b16 %v475
      %v544 = vunpack.c.h.b16 %v475
      %v545 = vunpack.c.l.b16 %v476
      %v546 = vunpack.c.h.b16 %v476
      %v547 = vunpack.c.l.b16 %v477
      %v548 = vunpack.c.h.b16 %v477
      %v549 = vunpack.c.l.b16 %v478
      %v550 = vunpack.c.h.b16 %v478
      %v551 = vunpack.c.l.b16 %v479
      %v552 = vunpack.c.h.b16 %v479
      %v553 = vunpack.c.l.b16 %v480
      %v554 = vunpack.c.h.b16 %v480
      %v555 = vunpack.c.l.b16 %v481
      %v556 = vunpack.c.h.b16 %v481
      %v557 = vunpack.c.l.b16 %v482
      %v558 = vunpack.c.h.b16 %v482
      %v559 = vunpack.c.l.b16 %v483
      %v560 = vunpack.c.h.b16 %v483
      %v561 = vunpack.c.l.b16 %v484
      %v562 = vunpack.c.h.b16 %v484
      %v563 = vunpack.c.l.b16 %v485
      %v564 = vunpack.c.h.b16 %v485
      %v565 = vunpack.c.l.b16 %v486
      %v566 = vunpack.c.h.b16 %v486
      %v567 = vunpack.c.l.b16 %v487
      %v568 = vunpack.c.h.b16 %v487
      %v569 = vunpack.c.l.b16 %v488
      %v570 = vunpack.c.h.b16 %v488
      %v571 = vunpack.c.l.b16 %v489
      %v572 = vunpack.c.h.b16 %v489
      %v573 = vunpack.c.l.b16 %v490
      %v574 = vunpack.c.h.b16 %v490
      %v575 = vunpack.c.l.b16 %v491
      %v576 = vunpack.c.h.b16 %v491
      %v577 = vunpack.c.l.b16 %v492
      %v578 = vunpack.c.h.b16 %v492
      %v579 = vunpack.c.l.b16 %v493
      %v580 = vunpack.c.h.b16 %v493
      %v581 = vunpack.c.l.b16 %v494
      %v582 = vunpack.c.h.b16 %v494
      %v583 = vunpack.c.l.b16 %v495
      %v584 = vunpack.c.h.b16 %v495
      %v585 = vunpack.c.l.b16 %v496
      %v586 = vunpack.c.h.b16 %v496
      %v587 = vunpack.c.l.b16 %v497
      %v588 = vunpack.c.h.b16 %v497
      %v589 = vunpack.c.l.b16 %v498
      %v590 = vunpack.c.h.b16 %v498
      %v591 = vunpack.c.l.b16 %v499
      %v592 = vunpack.c.h.b16 %v499
      %v593 = vunpack.c.l.b16 %v500
      %v594 = vunpack.c.h.b16 %v500
      %v595 = vunpack.c.l.b16 %v501
      %v596 = vunpack.c.h.b16 %v501
      %v597 = vunpack.c.l.b16 %v502
      %v598 = vunpack.c.h.b16 %v502
      %v599 = vpack.c.b16 %v539, %v535
      %v600 = vpack.c.b16 %v540, %v536
      %v601 = vpack.c.b16 %v541, %v537
      %v602 = vpack.c.b16 %v542, %v538
      %v603 = vpack.c.b16 %v547, %v543
      %v604 = vpack.c.b16 %v548, %v544
      %v605 = vpack.c.b16 %v549, %v545
      %v606 = vpack.c.b16 %v550, %v546
      %v607 = vpack.c.b16 %v555, %v551
      %v608 = vpack.c.b16 %v556, %v552
      %v609 = vpack.c.b16 %v557, %v553
      %v610 = vpack.c.b16 %v558, %v554
      %v611 = vpack.c.b16 %v563, %v559
      %v612 = vpack.c.b16 %v564, %v560
      %v613 = vpack.c.b16 %v565, %v561
      %v614 = vpack.c.b16 %v566, %v562
      %v615 = vpack.c.b16 %v571, %v567
      %v616 = vpack.c.b16 %v572, %v568
      %v617 = vpack.c.b16 %v573, %v569
      %v618 = vpack.c.b16 %v574, %v570
      %v619 = vpack.c.b16 %v579, %v575
      %v620 = vpack.c.b16 %v580, %v576
      %v621 = vpack.c.b16 %v581, %v577
      %v622 = vpack.c.b16 %v582, %v578
      %v623 = vpack.c.b16 %v587, %v583
      %v624 = vpack.c.b16 %v588, %v584
      %v625 = vpack.c.b16 %v589, %v585
      %v626 = vpack.c.b16 %v590, %v586
      %v627 = vpack.c.b16 %v595, %v591
      %v628 = vpack.c.b16 %v596, %v592
      %v629 = vpack.c.b16 %v597, %v593
      %v630 = vpack.c.b16 %v598, %v594
      %663 = vmatprep.subr.bf16.mxu0 %v600
      %664 = vmatpush1.bf16.msra.mxu0 %v599
      %665 = vmatprep.subr.bf16.mxu0 %v604
      %666 = vmatpush1.bf16.msra.mxu0 %v603
      %667 = vmatprep.subr.bf16.mxu0 %v608
      %668 = vmatpush1.bf16.msra.mxu0 %v607
      %669 = vmatprep.subr.bf16.mxu0 %v612
      %670 = vmatpush1.bf16.msra.mxu0 %v611
      %671 = vmatprep.subr.bf16.mxu0 %v616
      %672 = vmatpush1.bf16.msra.mxu0 %v615
      %673 = vmatprep.subr.bf16.mxu0 %v620
      %674 = vmatpush1.bf16.msra.mxu0 %v619
      %675 = vmatprep.subr.bf16.mxu0 %v624
      %676 = vmatpush1.bf16.msra.mxu0 %v623
      %677 = vmatprep.subr.bf16.mxu0 %v628
      %678 = vmatpush1.bf16.msra.mxu0 %v627
      %679 = vmatprep.subr.bf16.mxu0 0
      %680 = vmatpush1.bf16.msra.mxu0 0
      %681 = vmatprep.subr.bf16.mxu0 0
      %682 = vmatpush1.bf16.msra.mxu0 0
      %683 = vmatprep.subr.bf16.mxu0 0
      %684 = vmatpush1.bf16.msra.mxu0 0
      %685 = vmatprep.subr.bf16.mxu0 0
      %686 = vmatpush1.bf16.msra.mxu0 0
      %687 = vmatprep.subr.bf16.mxu0 0
      %688 = vmatpush1.bf16.msra.mxu0 0
      %689 = vmatprep.subr.bf16.mxu0 0
      %690 = vmatpush1.bf16.msra.mxu0 0
      %691 = vmatprep.subr.bf16.mxu0 0
      %692 = vmatpush1.bf16.msra.mxu0 0
      %693 = vmatprep.subr.bf16.mxu0 0
      %694 = vmatpush1.bf16.msra.mxu0 0
      %695 = vmatprep.mubr.bf16.mxu0 0
      %696 = vmatmul.mubr.bf16.gmra.mrb[0].mxu0 %v463
      %v697 = vpop.f32.mrb[0].mxu0
      %v698 = vadd.f32 0.0, %v697
      %v699 = vpop.f32.mrb[0].mxu0
      %v700 = vadd.f32 0.0, %v699
      %v701 = vpop.f32.mrb[0].mxu0
      %v702 = vadd.f32 0.0, %v701
      %v703 = vpop.f32.mrb[0].mxu0
      %v704 = vadd.f32 0.0, %v703
      %705 = vmatprep.mubr.bf16.mxu0 0
      %706 = vmatmul.mubr.bf16.gmra.mrb[0].mxu0 %v464
      %v707 = vpop.f32.mrb[0].mxu0
      %v708 = vadd.f32 0.0, %v707
      %v709 = vpop.f32.mrb[0].mxu0
      %v710 = vadd.f32 0.0, %v709
      %v711 = vpop.f32.mrb[0].mxu0
      %v712 = vadd.f32 0.0, %v711
      %v713 = vpop.f32.mrb[0].mxu0
      %v714 = vadd.f32 0.0, %v713
      %715 = vmatprep.mubr.bf16.mxu0 0
      %716 = vmatmul.mubr.bf16.gmra.mrb[0].mxu0 %v465
      %v717 = vpop.f32.mrb[0].mxu0
      %v718 = vadd.f32 0.0, %v717
      %v719 = vpop.f32.mrb[0].mxu0
      %v720 = vadd.f32 0.0, %v719
      %v721 = vpop.f32.mrb[0].mxu0
      %v722 = vadd.f32 0.0, %v721
      %v723 = vpop.f32.mrb[0].mxu0
      %v724 = vadd.f32 0.0, %v723
      %725 = vmatprep.mubr.bf16.mxu0 0
      %726 = vmatmul.mubr.bf16.gmra.mrb[0].mxu0 %v466
      %v727 = vpop.f32.mrb[0].mxu0
      %v728 = vadd.f32 0.0, %v727
      %v729 = vpop.f32.mrb[0].mxu0
      %v730 = vadd.f32 0.0, %v729
      %v731 = vpop.f32.mrb[0].mxu0
      %v732 = vadd.f32 0.0, %v731
      %v733 = vpop.f32.mrb[0].mxu0
      %v734 = vadd.f32 0.0, %v733
      %735 = vmatprep.mubr.bf16.mxu0 0
      %736 = vmatmul.mubr.bf16.gmra.mrb[0].mxu0 %v467
      %v737 = vpop.f32.mrb[0].mxu0
      %v738 = vadd.f32 0.0, %v737
      %v739 = vpop.f32.mrb[0].mxu0
      %v740 = vadd.f32 0.0, %v739
      %v741 = vpop.f32.mrb[0].mxu0
      %v742 = vadd.f32 0.0, %v741
      %v743 = vpop.f32.mrb[0].mxu0
      %v744 = vadd.f32 0.0, %v743
      %745 = vmatprep.mubr.bf16.mxu0 0
      %746 = vmatmul.mubr.bf16.gmra.mrb[0].mxu0 %v468
      %v747 = vpop.f32.mrb[0].mxu0
      %v748 = vadd.f32 0.0, %v747
      %v749 = vpop.f32.mrb[0].mxu0
      %v750 = vadd.f32 0.0, %v749
      %v751 = vpop.f32.mrb[0].mxu0
      %v752 = vadd.f32 0.0, %v751
      %v753 = vpop.f32.mrb[0].mxu0
      %v754 = vadd.f32 0.0, %v753
      %755 = vmatprep.mubr.bf16.mxu0 0
      %756 = vmatmul.mubr.bf16.gmra.mrb[0].mxu0 %v469
      %v757 = vpop.f32.mrb[0].mxu0
      %v758 = vadd.f32 0.0, %v757
      %v759 = vpop.f32.mrb[0].mxu0
      %v760 = vadd.f32 0.0, %v759
      %v761 = vpop.f32.mrb[0].mxu0
      %v762 = vadd.f32 0.0, %v761
      %v763 = vpop.f32.mrb[0].mxu0
      %v764 = vadd.f32 0.0, %v763
      %765 = vmatprep.mubr.bf16.mxu0 0
      %766 = vmatmul.mubr.bf16.gmra.mrb[0].mxu0 %v470
      %v767 = vpop.f32.mrb[0].mxu0
      %v768 = vadd.f32 0.0, %v767
      %v769 = vpop.f32.mrb[0].mxu0
      %v770 = vadd.f32 0.0, %v769
      %v771 = vpop.f32.mrb[0].mxu0
      %v772 = vadd.f32 0.0, %v771
      %v773 = vpop.f32.mrb[0].mxu0
      %v774 = vadd.f32 0.0, %v773
      %775 = vdwg.mxu0
      %776 = vmatprep.subr.bf16.mxu0 %v602
      %777 = vmatpush1.bf16.msra.mxu0 %v601
      %778 = vmatprep.subr.bf16.mxu0 %v606
      %779 = vmatpush1.bf16.msra.mxu0 %v605
      %780 = vmatprep.subr.bf16.mxu0 %v610
      %781 = vmatpush1.bf16.msra.mxu0 %v609
      %782 = vmatprep.subr.bf16.mxu0 %v614
      %783 = vmatpush1.bf16.msra.mxu0 %v613
      %784 = vmatprep.subr.bf16.mxu0 %v618
      %785 = vmatpush1.bf16.msra.mxu0 %v617
      %786 = vmatprep.subr.bf16.mxu0 %v622
      %787 = vmatpush1.bf16.msra.mxu0 %v621
      %788 = vmatprep.subr.bf16.mxu0 %v626
      %789 = vmatpush1.bf16.msra.mxu0 %v625
      %790 = vmatprep.subr.bf16.mxu0 %v630
      %791 = vmatpush1.bf16.msra.mxu0 %v629
      %792 = vmatprep.subr.bf16.mxu0 0
      %793 = vmatpush1.bf16.msra.mxu0 0
      %794 = vmatprep.subr.bf16.mxu0 0
      %795 = vmatpush1.bf16.msra.mxu0 0
      %796 = vmatprep.subr.bf16.mxu0 0
      %797 = vmatpush1.bf16.msra.mxu0 0
      %798 = vmatprep.subr.bf16.mxu0 0
      %799 = vmatpush1.bf16.msra.mxu0 0
      %800 = vmatprep.subr.bf16.mxu0 0
      %801 = vmatpush1.bf16.msra.mxu0 0
      %802 = vmatprep.subr.bf16.mxu0 0
      %803 = vmatpush1.bf16.msra.mxu0 0
      %804 = vmatprep.subr.bf16.mxu0 0
      %805 = vmatpush1.bf16.msra.mxu0 0
      %806 = vmatprep.subr.bf16.mxu0 0
      %807 = vmatpush1.bf16.msra.mxu0 0
      %808 = vmatprep.mubr.bf16.mxu0 0
      %809 = vmatmul.mubr.bf16.gmra.mrb[0].mxu0 %v463
      %v810 = vpop.f32.mrb[0].mxu0
      %v811 = vadd.f32 0.0, %v810
      %v812 = vpop.f32.mrb[0].mxu0
      %v813 = vadd.f32 0.0, %v812
      %v814 = vpop.f32.mrb[0].mxu0
      %v815 = vadd.f32 0.0, %v814
      %v816 = vpop.f32.mrb[0].mxu0
      %v817 = vadd.f32 0.0, %v816
      %818 = vmatprep.mubr.bf16.mxu0 0
      %819 = vmatmul.mubr.bf16.gmra.mrb[0].mxu0 %v464
      %v820 = vpop.f32.mrb[0].mxu0
      %v821 = vadd.f32 0.0, %v820
      %v822 = vpop.f32.mrb[0].mxu0
      %v823 = vadd.f32 0.0, %v822
      %v824 = vpop.f32.mrb[0].mxu0
      %v825 = vadd.f32 0.0, %v824
      %v826 = vpop.f32.mrb[0].mxu0
      %v827 = vadd.f32 0.0, %v826
      %828 = vmatprep.mubr.bf16.mxu0 0
      %829 = vmatmul.mubr.bf16.gmra.mrb[0].mxu0 %v465
      %v830 = vpop.f32.mrb[0].mxu0
      %v831 = vadd.f32 0.0, %v830
      %v832 = vpop.f32.mrb[0].mxu0
      %v833 = vadd.f32 0.0, %v832
      %v834 = vpop.f32.mrb[0].mxu0
      %v835 = vadd.f32 0.0, %v834
      %v836 = vpop.f32.mrb[0].mxu0
      %v837 = vadd.f32 0.0, %v836
      %838 = vmatprep.mubr.bf16.mxu0 0
      %839 = vmatmul.mubr.bf16.gmra.mrb[0].mxu0 %v466
      %v840 = vpop.f32.mrb[0].mxu0
      %v841 = vadd.f32 0.0, %v840
      %v842 = vpop.f32.mrb[0].mxu0
      %v843 = vadd.f32 0.0, %v842
      %v844 = vpop.f32.mrb[0].mxu0
      %v845 = vadd.f32 0.0, %v844
      %v846 = vpop.f32.mrb[0].mxu0
      %v847 = vadd.f32 0.0, %v846
      %848 = vmatprep.mubr.bf16.mxu0 0
      %849 = vmatmul.mubr.bf16.gmra.mrb[0].mxu0 %v467
      %v850 = vpop.f32.mrb[0].mxu0
      %v851 = vadd.f32 0.0, %v850
      %v852 = vpop.f32.mrb[0].mxu0
      %v853 = vadd.f32 0.0, %v852
      %v854 = vpop.f32.mrb[0].mxu0
      %v855 = vadd.f32 0.0, %v854
      %v856 = vpop.f32.mrb[0].mxu0
      %v857 = vadd.f32 0.0, %v856
      %858 = vmatprep.mubr.bf16.mxu0 0
      %859 = vmatmul.mubr.bf16.gmra.mrb[0].mxu0 %v468
      %v860 = vpop.f32.mrb[0].mxu0
      %v861 = vadd.f32 0.0, %v860
      %v862 = vpop.f32.mrb[0].mxu0
      %v863 = vadd.f32 0.0, %v862
      %v864 = vpop.f32.mrb[0].mxu0
      %v865 = vadd.f32 0.0, %v864
      %v866 = vpop.f32.mrb[0].mxu0
      %v867 = vadd.f32 0.0, %v866
      %868 = vmatprep.mubr.bf16.mxu0 0
      %869 = vmatmul.mubr.bf16.gmra.mrb[0].mxu0 %v469
      %v870 = vpop.f32.mrb[0].mxu0
      %v871 = vadd.f32 0.0, %v870
      %v872 = vpop.f32.mrb[0].mxu0
      %v873 = vadd.f32 0.0, %v872
      %v874 = vpop.f32.mrb[0].mxu0
      %v875 = vadd.f32 0.0, %v874
      %v876 = vpop.f32.mrb[0].mxu0
      %v877 = vadd.f32 0.0, %v876
      %878 = vmatprep.mubr.bf16.mxu0 0
      %879 = vmatmul.mubr.bf16.gmra.mrb[0].mxu0 %v470
      %v880 = vpop.f32.mrb[0].mxu0
      %v881 = vadd.f32 0.0, %v880
      %v882 = vpop.f32.mrb[0].mxu0
      %v883 = vadd.f32 0.0, %v882
      %v884 = vpop.f32.mrb[0].mxu0
      %v885 = vadd.f32 0.0, %v884
      %v886 = vpop.f32.mrb[0].mxu0
      %v887 = vadd.f32 0.0, %v886
      %888 = vdwg.mxu0
      %v889 = vpack.c.bf16 %v702, %v698
      %v890 = vpack.c.bf16 %v704, %v700
      %v891 = vpack.c.bf16 %v815, %v811
      %v892 = vpack.c.bf16 %v817, %v813
      %v893 = vpack.c.bf16 %v712, %v708
      %v894 = vpack.c.bf16 %v714, %v710
      %v895 = vpack.c.bf16 %v825, %v821
      %v896 = vpack.c.bf16 %v827, %v823
      %v897 = vpack.c.bf16 %v722, %v718
      %v898 = vpack.c.bf16 %v724, %v720
      %v899 = vpack.c.bf16 %v835, %v831
      %v900 = vpack.c.bf16 %v837, %v833
      %v901 = vpack.c.bf16 %v732, %v728
      %v902 = vpack.c.bf16 %v734, %v730
      %v903 = vpack.c.bf16 %v845, %v841
      %v904 = vpack.c.bf16 %v847, %v843
      %v905 = vpack.c.bf16 %v742, %v738
      %v906 = vpack.c.bf16 %v744, %v740
      %v907 = vpack.c.bf16 %v855, %v851
      %v908 = vpack.c.bf16 %v857, %v853
      %v909 = vpack.c.bf16 %v752, %v748
      %v910 = vpack.c.bf16 %v754, %v750
      %v911 = vpack.c.bf16 %v865, %v861
      %v912 = vpack.c.bf16 %v867, %v863
      %v913 = vpack.c.bf16 %v762, %v758
      %v914 = vpack.c.bf16 %v764, %v760
      %v915 = vpack.c.bf16 %v875, %v871
      %v916 = vpack.c.bf16 %v877, %v873
      %v917 = vpack.c.bf16 %v772, %v768
      %v918 = vpack.c.bf16 %v774, %v770
      %v919 = vpack.c.bf16 %v885, %v881
      %v920 = vpack.c.bf16 %v887, %v883
      %v921 = vld [vmem:[%s5] sm:$0xff]
      %v922 = vld [vmem:[%s5 + $0x8] sm:$0xff]
      %v923 = vld [vmem:[%s5 + $0x10] sm:$0xff]
      %v924 = vld [vmem:[%s5 + $0x18] sm:$0xff]
      %v925 = vld [vmem:[%s5 + $0x20] sm:$0xff]
      %v926 = vld [vmem:[%s5 + $0x28] sm:$0xff]
      %v927 = vld [vmem:[%s5 + $0x30] sm:$0xff]
      %v928 = vld [vmem:[%s5 + $0x38] sm:$0xff]
      %v929 = vld [vmem:[%s5 + $0x40] sm:$0xff]
      %v930 = vld [vmem:[%s5 + $0x48] sm:$0xff]
      %v931 = vld [vmem:[%s5 + $0x50] sm:$0xff]
      %v932 = vld [vmem:[%s5 + $0x58] sm:$0xff]
      %v933 = vld [vmem:[%s5 + $0x60] sm:$0xff]
      %v934 = vld [vmem:[%s5 + $0x68] sm:$0xff]
      %v935 = vld [vmem:[%s5 + $0x70] sm:$0xff]
      %v936 = vld [vmem:[%s5 + $0x78] sm:$0xff]
      %v937 = vld [vmem:[%s3] sm:$0xf]
      %v938 = vld [vmem:[%s3 + $0x4] sm:$0xf]
      %v939 = vld [vmem:[%s3 + $0x8] sm:$0xf]
      %v940 = vld [vmem:[%s3 + $0xc] sm:$0xf]
      %v941 = vld [vmem:[%s3 + $0x10] sm:$0xf]
      %v942 = vld [vmem:[%s3 + $0x14] sm:$0xf]
      %v943 = vld [vmem:[%s3 + $0x18] sm:$0xf]
      %v944 = vld [vmem:[%s3 + $0x1c] sm:$0xf]
      %v945 = vld [vmem:[%s3 + $0x20] sm:$0xf]
      %v946 = vld [vmem:[%s3 + $0x24] sm:$0xf]
      %v947 = vld [vmem:[%s3 + $0x28] sm:$0xf]
      %v948 = vld [vmem:[%s3 + $0x2c] sm:$0xf]
      %v949 = vld [vmem:[%s3 + $0x30] sm:$0xf]
      %v950 = vld [vmem:[%s3 + $0x34] sm:$0xf]
      %v951 = vld [vmem:[%s3 + $0x38] sm:$0xf]
      %v952 = vld [vmem:[%s3 + $0x3c] sm:$0xf]
      %s953 = scalar_lea.vmem %s3, 64
      %v954 = vld [vmem:[%s953] sm:$0xf]
      %v955 = vld [vmem:[%s953 + $0x4] sm:$0xf]
      %v956 = vld [vmem:[%s953 + $0x8] sm:$0xf]
      %v957 = vld [vmem:[%s953 + $0xc] sm:$0xf]
      %v958 = vld [vmem:[%s953 + $0x10] sm:$0xf]
      %v959 = vld [vmem:[%s953 + $0x14] sm:$0xf]
      %v960 = vld [vmem:[%s953 + $0x18] sm:$0xf]
      %v961 = vld [vmem:[%s953 + $0x1c] sm:$0xf]
      %v962 = vld [vmem:[%s953 + $0x20] sm:$0xf]
      %v963 = vld [vmem:[%s953 + $0x24] sm:$0xf]
      %v964 = vld [vmem:[%s953 + $0x28] sm:$0xf]
      %v965 = vld [vmem:[%s953 + $0x2c] sm:$0xf]
      %v966 = vld [vmem:[%s953 + $0x30] sm:$0xf]
      %v967 = vld [vmem:[%s953 + $0x34] sm:$0xf]
      %v968 = vld [vmem:[%s953 + $0x38] sm:$0xf]
      %v969 = vld [vmem:[%s953 + $0x3c] sm:$0xf]
      %v986 = vunpack.c.l.b16 %v954
      %v987 = vunpack.c.l.b16 %v955
      %v988 = vunpack.c.l.b16 %v956
      %v989 = vunpack.c.l.b16 %v957
      %v990 = vunpack.c.l.b16 %v958
      %v991 = vunpack.c.l.b16 %v959
      %v992 = vunpack.c.l.b16 %v960
      %v993 = vunpack.c.l.b16 %v961
      %v994 = vunpack.c.l.b16 %v962
      %v995 = vunpack.c.l.b16 %v963
      %v996 = vunpack.c.l.b16 %v964
      %v997 = vunpack.c.l.b16 %v965
      %v998 = vunpack.c.l.b16 %v966
      %v999 = vunpack.c.l.b16 %v967
      %v1000 = vunpack.c.l.b16 %v968
      %v1001 = vunpack.c.l.b16 %v969
      %v1002 = vpack.c.b16 %v987, %v986
      %v1003 = vpack.c.b16 %v989, %v988
      %v1004 = vpack.c.b16 %v991, %v990
      %v1005 = vpack.c.b16 %v993, %v992
      %v1006 = vpack.c.b16 %v995, %v994
      %v1007 = vpack.c.b16 %v997, %v996
      %v1008 = vpack.c.b16 %v999, %v998
      %v1009 = vpack.c.b16 %v1001, %v1000
      %1018 = vmatprep.subr.bf16.mxu0 0
      %1019 = vmatpush1.bf16.msra.mxu0 %v890
      %1020 = vmatprep.subr.bf16.mxu0 0
      %1021 = vmatpush1.bf16.msra.mxu0 %v894
      %1022 = vmatprep.subr.bf16.mxu0 0
      %1023 = vmatpush1.bf16.msra.mxu0 %v898
      %1024 = vmatprep.subr.bf16.mxu0 0
      %1025 = vmatpush1.bf16.msra.mxu0 %v902
      %1026 = vmatprep.subr.bf16.mxu0 0
      %1027 = vmatpush1.bf16.msra.mxu0 %v906
      %1028 = vmatprep.subr.bf16.mxu0 0
      %1029 = vmatpush1.bf16.msra.mxu0 %v910
      %1030 = vmatprep.subr.bf16.mxu0 0
      %1031 = vmatpush1.bf16.msra.mxu0 %v914
      %1032 = vmatprep.subr.bf16.mxu0 0
      %1033 = vmatpush1.bf16.msra.mxu0 %v918
      %1034 = vmatprep.subr.bf16.mxu0 0
      %1035 = vmatpush1.bf16.msra.mxu0 0
      %1036 = vmatprep.subr.bf16.mxu0 0
      %1037 = vmatpush1.bf16.msra.mxu0 0
      %1038 = vmatprep.subr.bf16.mxu0 0
      %1039 = vmatpush1.bf16.msra.mxu0 0
      %1040 = vmatprep.subr.bf16.mxu0 0
      %1041 = vmatpush1.bf16.msra.mxu0 0
      %1042 = vmatprep.subr.bf16.mxu0 0
      %1043 = vmatpush1.bf16.msra.mxu0 0
      %1044 = vmatprep.subr.bf16.mxu0 0
      %1045 = vmatpush1.bf16.msra.mxu0 0
      %1046 = vmatprep.subr.bf16.mxu0 0
      %1047 = vmatpush1.bf16.msra.mxu0 0
      %1048 = vmatprep.subr.bf16.mxu0 0
      %1049 = vmatpush1.bf16.msra.mxu0 0
      %1050 = vmatprep.mubr.bf16.mxu0 0
      %1051 = vmatmul.mubr.bf16.gmra.mrb[0].mxu0 %v1002
      %v1052 = vpop.f32.mrb[0].mxu0
      %v1053 = vadd.f32 0.0, %v1052
      %v1054 = vpop.f32.mrb[0].mxu0
      %v1055 = vpop.f32.mrb[0].mxu0
      %v1056 = vadd.f32 0.0, %v1055
      %v1057 = vpop.f32.mrb[0].mxu0
      %1058 = vmatprep.mubr.bf16.mxu0 0
      %1059 = vmatmul.mubr.bf16.gmra.mrb[0].mxu0 %v1003
      %v1060 = vpop.f32.mrb[0].mxu0
      %v1061 = vadd.f32 0.0, %v1060
      %v1062 = vpop.f32.mrb[0].mxu0
      %v1063 = vpop.f32.mrb[0].mxu0
      %v1064 = vadd.f32 0.0, %v1063
      %v1065 = vpop.f32.mrb[0].mxu0
      %1066 = vmatprep.mubr.bf16.mxu0 0
      %1067 = vmatmul.mubr.bf16.gmra.mrb[0].mxu0 %v1004
      %v1068 = vpop.f32.mrb[0].mxu0
      %v1069 = vadd.f32 0.0, %v1068
      %v1070 = vpop.f32.mrb[0].mxu0
      %v1071 = vpop.f32.mrb[0].mxu0
      %v1072 = vadd.f32 0.0, %v1071
      %v1073 = vpop.f32.mrb[0].mxu0
      %1074 = vmatprep.mubr.bf16.mxu0 0
      %1075 = vmatmul.mubr.bf16.gmra.mrb[0].mxu0 %v1005
      %v1076 = vpop.f32.mrb[0].mxu0
      %v1077 = vadd.f32 0.0, %v1076
      %v1078 = vpop.f32.mrb[0].mxu0
      %v1079 = vpop.f32.mrb[0].mxu0
      %v1080 = vadd.f32 0.0, %v1079
      %v1081 = vpop.f32.mrb[0].mxu0
      %1082 = vmatprep.mubr.bf16.mxu0 0
      %1083 = vmatmul.mubr.bf16.gmra.mrb[0].mxu0 %v1006
      %v1084 = vpop.f32.mrb[0].mxu0
      %v1085 = vadd.f32 0.0, %v1084
      %v1086 = vpop.f32.mrb[0].mxu0
      %v1087 = vpop.f32.mrb[0].mxu0
      %v1088 = vadd.f32 0.0, %v1087
      %v1089 = vpop.f32.mrb[0].mxu0
      %1090 = vmatprep.mubr.bf16.mxu0 0
      %1091 = vmatmul.mubr.bf16.gmra.mrb[0].mxu0 %v1007
      %v1092 = vpop.f32.mrb[0].mxu0
      %v1093 = vadd.f32 0.0, %v1092
      %v1094 = vpop.f32.mrb[0].mxu0
      %v1095 = vpop.f32.mrb[0].mxu0
      %v1096 = vadd.f32 0.0, %v1095
      %v1097 = vpop.f32.mrb[0].mxu0
      %1098 = vmatprep.mubr.bf16.mxu0 0
      %1099 = vmatmul.mubr.bf16.gmra.mrb[0].mxu0 %v1008
      %v1100 = vpop.f32.mrb[0].mxu0
      %v1101 = vadd.f32 0.0, %v1100
      %v1102 = vpop.f32.mrb[0].mxu0
      %v1103 = vpop.f32.mrb[0].mxu0
      %v1104 = vadd.f32 0.0, %v1103
      %v1105 = vpop.f32.mrb[0].mxu0
      %1106 = vmatprep.mubr.bf16.mxu0 0
      %1107 = vmatmul.mubr.bf16.gmra.mrb[0].mxu0 %v1009
      %v1108 = vpop.f32.mrb[0].mxu0
      %v1109 = vadd.f32 0.0, %v1108
      %v1110 = vpop.f32.mrb[0].mxu0
      %v1111 = vpop.f32.mrb[0].mxu0
      %v1112 = vadd.f32 0.0, %v1111
      %v1113 = vpop.f32.mrb[0].mxu0
      %1114 = vdwg.mxu0
      %s1115 = scalar_lea.vmem %s3, 128
      %v1116 = vld [vmem:[%s1115] sm:$0xf]
      %v1117 = vld [vmem:[%s1115 + $0x4] sm:$0xf]
      %v1118 = vld [vmem:[%s1115 + $0x8] sm:$0xf]
      %v1119 = vld [vmem:[%s1115 + $0xc] sm:$0xf]
      %v1120 = vld [vmem:[%s1115 + $0x10] sm:$0xf]
      %v1121 = vld [vmem:[%s1115 + $0x14] sm:$0xf]
      %v1122 = vld [vmem:[%s1115 + $0x18] sm:$0xf]
      %v1123 = vld [vmem:[%s1115 + $0x1c] sm:$0xf]
      %v1124 = vld [vmem:[%s1115 + $0x20] sm:$0xf]
      %v1125 = vld [vmem:[%s1115 + $0x24] sm:$0xf]
      %v1126 = vld [vmem:[%s1115 + $0x28] sm:$0xf]
      %v1127 = vld [vmem:[%s1115 + $0x2c] sm:$0xf]
      %v1128 = vld [vmem:[%s1115 + $0x30] sm:$0xf]
      %v1129 = vld [vmem:[%s1115 + $0x34] sm:$0xf]
      %v1130 = vld [vmem:[%s1115 + $0x38] sm:$0xf]
      %v1131 = vld [vmem:[%s1115 + $0x3c] sm:$0xf]
      %s1132 = scalar_lea.vmem %s3, 192
      %v1133 = vld [vmem:[%s1132] sm:$0xf]
      %v1134 = vld [vmem:[%s1132 + $0x4] sm:$0xf]
      %v1135 = vld [vmem:[%s1132 + $0x8] sm:$0xf]
      %v1136 = vld [vmem:[%s1132 + $0xc] sm:$0xf]
      %v1137 = vld [vmem:[%s1132 + $0x10] sm:$0xf]
      %v1138 = vld [vmem:[%s1132 + $0x14] sm:$0xf]
      %v1139 = vld [vmem:[%s1132 + $0x18] sm:$0xf]
      %v1140 = vld [vmem:[%s1132 + $0x1c] sm:$0xf]
      %v1141 = vld [vmem:[%s1132 + $0x20] sm:$0xf]
      %v1142 = vld [vmem:[%s1132 + $0x24] sm:$0xf]
      %v1143 = vld [vmem:[%s1132 + $0x28] sm:$0xf]
      %v1144 = vld [vmem:[%s1132 + $0x2c] sm:$0xf]
      %v1145 = vld [vmem:[%s1132 + $0x30] sm:$0xf]
      %v1146 = vld [vmem:[%s1132 + $0x34] sm:$0xf]
      %v1147 = vld [vmem:[%s1132 + $0x38] sm:$0xf]
      %v1148 = vld [vmem:[%s1132 + $0x3c] sm:$0xf]
      %v1165 = vunpack.c.l.b16 %v1133
      %v1166 = vunpack.c.l.b16 %v1134
      %v1167 = vunpack.c.l.b16 %v1135
      %v1168 = vunpack.c.l.b16 %v1136
      %v1169 = vunpack.c.l.b16 %v1137
      %v1170 = vunpack.c.l.b16 %v1138
      %v1171 = vunpack.c.l.b16 %v1139
      %v1172 = vunpack.c.l.b16 %v1140
      %v1173 = vunpack.c.l.b16 %v1141
      %v1174 = vunpack.c.l.b16 %v1142
      %v1175 = vunpack.c.l.b16 %v1143
      %v1176 = vunpack.c.l.b16 %v1144
      %v1177 = vunpack.c.l.b16 %v1145
      %v1178 = vunpack.c.l.b16 %v1146
      %v1179 = vunpack.c.l.b16 %v1147
      %v1180 = vunpack.c.l.b16 %v1148
      %v1181 = vpack.c.b16 %v1166, %v1165
      %v1182 = vpack.c.b16 %v1168, %v1167
      %v1183 = vpack.c.b16 %v1170, %v1169
      %v1184 = vpack.c.b16 %v1172, %v1171
      %v1185 = vpack.c.b16 %v1174, %v1173
      %v1186 = vpack.c.b16 %v1176, %v1175
      %v1187 = vpack.c.b16 %v1178, %v1177
      %v1188 = vpack.c.b16 %v1180, %v1179
      %1197 = vmatprep.subr.bf16.mxu0 0
      %1198 = vmatpush1.bf16.msra.mxu0 %v892
      %1199 = vmatprep.subr.bf16.mxu0 0
      %1200 = vmatpush1.bf16.msra.mxu0 %v896
      %1201 = vmatprep.subr.bf16.mxu0 0
      %1202 = vmatpush1.bf16.msra.mxu0 %v900
      %1203 = vmatprep.subr.bf16.mxu0 0
      %1204 = vmatpush1.bf16.msra.mxu0 %v904
      %1205 = vmatprep.subr.bf16.mxu0 0
      %1206 = vmatpush1.bf16.msra.mxu0 %v908
      %1207 = vmatprep.subr.bf16.mxu0 0
      %1208 = vmatpush1.bf16.msra.mxu0 %v912
      %1209 = vmatprep.subr.bf16.mxu0 0
      %1210 = vmatpush1.bf16.msra.mxu0 %v916
      %1211 = vmatprep.subr.bf16.mxu0 0
      %1212 = vmatpush1.bf16.msra.mxu0 %v920
      %1213 = vmatprep.subr.bf16.mxu0 0
      %1214 = vmatpush1.bf16.msra.mxu0 0
      %1215 = vmatprep.subr.bf16.mxu0 0
      %1216 = vmatpush1.bf16.msra.mxu0 0
      %1217 = vmatprep.subr.bf16.mxu0 0
      %1218 = vmatpush1.bf16.msra.mxu0 0
      %1219 = vmatprep.subr.bf16.mxu0 0
      %1220 = vmatpush1.bf16.msra.mxu0 0
      %1221 = vmatprep.subr.bf16.mxu0 0
      %1222 = vmatpush1.bf16.msra.mxu0 0
      %1223 = vmatprep.subr.bf16.mxu0 0
      %1224 = vmatpush1.bf16.msra.mxu0 0
      %1225 = vmatprep.subr.bf16.mxu0 0
      %1226 = vmatpush1.bf16.msra.mxu0 0
      %1227 = vmatprep.subr.bf16.mxu0 0
      %1228 = vmatpush1.bf16.msra.mxu0 0
      %1229 = vmatprep.mubr.bf16.mxu0 0
      %1230 = vmatmul.mubr.bf16.gmra.mrb[0].mxu0 %v1181
      %v1231 = vpop.f32.mrb[0].mxu0
      %v1232 = vadd.f32 0.0, %v1231
      %v1233 = vpop.f32.mrb[0].mxu0
      %v1234 = vpop.f32.mrb[0].mxu0
      %v1235 = vadd.f32 0.0, %v1234
      %v1236 = vpop.f32.mrb[0].mxu0
      %1237 = vmatprep.mubr.bf16.mxu0 0
      %1238 = vmatmul.mubr.bf16.gmra.mrb[0].mxu0 %v1182
      %v1239 = vpop.f32.mrb[0].mxu0
      %v1240 = vadd.f32 0.0, %v1239
      %v1241 = vpop.f32.mrb[0].mxu0
      %v1242 = vpop.f32.mrb[0].mxu0
      %v1243 = vadd.f32 0.0, %v1242
      %v1244 = vpop.f32.mrb[0].mxu0
      %1245 = vmatprep.mubr.bf16.mxu0 0
      %1246 = vmatmul.mubr.bf16.gmra.mrb[0].mxu0 %v1183
      %v1247 = vpop.f32.mrb[0].mxu0
      %v1248 = vadd.f32 0.0, %v1247
      %v1249 = vpop.f32.mrb[0].mxu0
      %v1250 = vpop.f32.mrb[0].mxu0
      %v1251 = vadd.f32 0.0, %v1250
      %v1252 = vpop.f32.mrb[0].mxu0
      %1253 = vmatprep.mubr.bf16.mxu0 0
      %1254 = vmatmul.mubr.bf16.gmra.mrb[0].mxu0 %v1184
      %v1255 = vpop.f32.mrb[0].mxu0
      %v1256 = vadd.f32 0.0, %v1255
      %v1257 = vpop.f32.mrb[0].mxu0
      %v1258 = vpop.f32.mrb[0].mxu0
      %v1259 = vadd.f32 0.0, %v1258
      %v1260 = vpop.f32.mrb[0].mxu0
      %1261 = vmatprep.mubr.bf16.mxu0 0
      %1262 = vmatmul.mubr.bf16.gmra.mrb[0].mxu0 %v1185
      %v1263 = vpop.f32.mrb[0].mxu0
      %v1264 = vadd.f32 0.0, %v1263
      %v1265 = vpop.f32.mrb[0].mxu0
      %v1266 = vpop.f32.mrb[0].mxu0
      %v1267 = vadd.f32 0.0, %v1266
      %v1268 = vpop.f32.mrb[0].mxu0
      %1269 = vmatprep.mubr.bf16.mxu0 0
      %1270 = vmatmul.mubr.bf16.gmra.mrb[0].mxu0 %v1186
      %v1271 = vpop.f32.mrb[0].mxu0
      %v1272 = vadd.f32 0.0, %v1271
      %v1273 = vpop.f32.mrb[0].mxu0
      %v1274 = vpop.f32.mrb[0].mxu0
      %v1275 = vadd.f32 0.0, %v1274
      %v1276 = vpop.f32.mrb[0].mxu0
      %1277 = vmatprep.mubr.bf16.mxu0 0
      %1278 = vmatmul.mubr.bf16.gmra.mrb[0].mxu0 %v1187
      %v1279 = vpop.f32.mrb[0].mxu0
      %v1280 = vadd.f32 0.0, %v1279
      %v1281 = vpop.f32.mrb[0].mxu0
      %v1282 = vpop.f32.mrb[0].mxu0
      %v1283 = vadd.f32 0.0, %v1282
      %v1284 = vpop.f32.mrb[0].mxu0
      %1285 = vmatprep.mubr.bf16.mxu0 0
      %1286 = vmatmul.mubr.bf16.gmra.mrb[0].mxu0 %v1188
      %v1287 = vpop.f32.mrb[0].mxu0
      %v1288 = vadd.f32 0.0, %v1287
      %v1289 = vpop.f32.mrb[0].mxu0
      %v1290 = vpop.f32.mrb[0].mxu0
      %v1291 = vadd.f32 0.0, %v1290
      %v1292 = vpop.f32.mrb[0].mxu0
      %1293 = vdwg.mxu0
      %v1294 = vadd.f32 %v447, %v921
      %v1295 = vadd.f32 %v448, %v922
      %v1296 = vadd.f32 %v449, %v923
      %v1297 = vadd.f32 %v450, %v924
      %v1298 = vadd.f32 %v451, %v925
      %v1299 = vadd.f32 %v452, %v926
      %v1300 = vadd.f32 %v453, %v927
      %v1301 = vadd.f32 %v454, %v928
      %v1302 = vadd.f32 %v455, %v929
      %v1303 = vadd.f32 %v456, %v930
      %v1304 = vadd.f32 %v457, %v931
      %v1305 = vadd.f32 %v458, %v932
      %v1306 = vadd.f32 %v459, %v933
      %v1307 = vadd.f32 %v460, %v934
      %v1308 = vadd.f32 %v461, %v935
      %v1309 = vadd.f32 %v462, %v936
      %v1326 = vunpack.c.l.b16 %v937
      %v1327 = vunpack.c.l.b16 %v938
      %v1328 = vunpack.c.l.b16 %v939
      %v1329 = vunpack.c.l.b16 %v940
      %v1330 = vunpack.c.l.b16 %v941
      %v1331 = vunpack.c.l.b16 %v942
      %v1332 = vunpack.c.l.b16 %v943
      %v1333 = vunpack.c.l.b16 %v944
      %v1334 = vunpack.c.l.b16 %v945
      %v1335 = vunpack.c.l.b16 %v946
      %v1336 = vunpack.c.l.b16 %v947
      %v1337 = vunpack.c.l.b16 %v948
      %v1338 = vunpack.c.l.b16 %v949
      %v1339 = vunpack.c.l.b16 %v950
      %v1340 = vunpack.c.l.b16 %v951
      %v1341 = vunpack.c.l.b16 %v952
      %v1342 = vpack.c.b16 %v1327, %v1326
      %v1343 = vpack.c.b16 %v1329, %v1328
      %v1344 = vpack.c.b16 %v1331, %v1330
      %v1345 = vpack.c.b16 %v1333, %v1332
      %v1346 = vpack.c.b16 %v1335, %v1334
      %v1347 = vpack.c.b16 %v1337, %v1336
      %v1348 = vpack.c.b16 %v1339, %v1338
      %v1349 = vpack.c.b16 %v1341, %v1340
      %1358 = vmatprep.subr.bf16.mxu0 0
      %1359 = vmatpush1.bf16.msra.mxu0 %v889
      %1360 = vmatprep.subr.bf16.mxu0 0
      %1361 = vmatpush1.bf16.msra.mxu0 %v893
      %1362 = vmatprep.subr.bf16.mxu0 0
      %1363 = vmatpush1.bf16.msra.mxu0 %v897
      %1364 = vmatprep.subr.bf16.mxu0 0
      %1365 = vmatpush1.bf16.msra.mxu0 %v901
      %1366 = vmatprep.subr.bf16.mxu0 0
      %1367 = vmatpush1.bf16.msra.mxu0 %v905
      %1368 = vmatprep.subr.bf16.mxu0 0
      %1369 = vmatpush1.bf16.msra.mxu0 %v909
      %1370 = vmatprep.subr.bf16.mxu0 0
      %1371 = vmatpush1.bf16.msra.mxu0 %v913
      %1372 = vmatprep.subr.bf16.mxu0 0
      %1373 = vmatpush1.bf16.msra.mxu0 %v917
      %1374 = vmatprep.subr.bf16.mxu0 0
      %1375 = vmatpush1.bf16.msra.mxu0 0
      %1376 = vmatprep.subr.bf16.mxu0 0
      %1377 = vmatpush1.bf16.msra.mxu0 0
      %1378 = vmatprep.subr.bf16.mxu0 0
      %1379 = vmatpush1.bf16.msra.mxu0 0
      %1380 = vmatprep.subr.bf16.mxu0 0
      %1381 = vmatpush1.bf16.msra.mxu0 0
      %1382 = vmatprep.subr.bf16.mxu0 0
      %1383 = vmatpush1.bf16.msra.mxu0 0
      %1384 = vmatprep.subr.bf16.mxu0 0
      %1385 = vmatpush1.bf16.msra.mxu0 0
      %1386 = vmatprep.subr.bf16.mxu0 0
      %1387 = vmatpush1.bf16.msra.mxu0 0
      %1388 = vmatprep.subr.bf16.mxu0 0
      %1389 = vmatpush1.bf16.msra.mxu0 0
      %1390 = vmatprep.mubr.bf16.mxu0 0
      %1391 = vmatmul.mubr.bf16.gmra.mrb[0].mxu0 %v1342
      %v1392 = vpop.f32.mrb[0].mxu0
      %v1393 = vadd.f32 %v1053, %v1392
      %v1394 = vpop.f32.mrb[0].mxu0
      %v1395 = vpop.f32.mrb[0].mxu0
      %v1396 = vadd.f32 %v1056, %v1395
      %v1397 = vpop.f32.mrb[0].mxu0
      %1398 = vmatprep.mubr.bf16.mxu0 0
      %1399 = vmatmul.mubr.bf16.gmra.mrb[0].mxu0 %v1343
      %v1400 = vpop.f32.mrb[0].mxu0
      %v1401 = vadd.f32 %v1061, %v1400
      %v1402 = vpop.f32.mrb[0].mxu0
      %v1403 = vpop.f32.mrb[0].mxu0
      %v1404 = vadd.f32 %v1064, %v1403
      %v1405 = vpop.f32.mrb[0].mxu0
      %1406 = vmatprep.mubr.bf16.mxu0 0
      %1407 = vmatmul.mubr.bf16.gmra.mrb[0].mxu0 %v1344
      %v1408 = vpop.f32.mrb[0].mxu0
      %v1409 = vadd.f32 %v1069, %v1408
      %v1410 = vpop.f32.mrb[0].mxu0
      %v1411 = vpop.f32.mrb[0].mxu0
      %v1412 = vadd.f32 %v1072, %v1411
      %v1413 = vpop.f32.mrb[0].mxu0
      %1414 = vmatprep.mubr.bf16.mxu0 0
      %1415 = vmatmul.mubr.bf16.gmra.mrb[0].mxu0 %v1345
      %v1416 = vpop.f32.mrb[0].mxu0
      %v1417 = vadd.f32 %v1077, %v1416
      %v1418 = vpop.f32.mrb[0].mxu0
      %v1419 = vpop.f32.mrb[0].mxu0
      %v1420 = vadd.f32 %v1080, %v1419
      %v1421 = vpop.f32.mrb[0].mxu0
      %1422 = vmatprep.mubr.bf16.mxu0 0
      %1423 = vmatmul.mubr.bf16.gmra.mrb[0].mxu0 %v1346
      %v1424 = vpop.f32.mrb[0].mxu0
      %v1425 = vadd.f32 %v1085, %v1424
      %v1426 = vpop.f32.mrb[0].mxu0
      %v1427 = vpop.f32.mrb[0].mxu0
      %v1428 = vadd.f32 %v1088, %v1427
      %v1429 = vpop.f32.mrb[0].mxu0
      %1430 = vmatprep.mubr.bf16.mxu0 0
      %1431 = vmatmul.mubr.bf16.gmra.mrb[0].mxu0 %v1347
      %v1432 = vpop.f32.mrb[0].mxu0
      %v1433 = vadd.f32 %v1093, %v1432
      %v1434 = vpop.f32.mrb[0].mxu0
      %v1435 = vpop.f32.mrb[0].mxu0
      %v1436 = vadd.f32 %v1096, %v1435
      %v1437 = vpop.f32.mrb[0].mxu0
      %1438 = vmatprep.mubr.bf16.mxu0 0
      %1439 = vmatmul.mubr.bf16.gmra.mrb[0].mxu0 %v1348
      %v1440 = vpop.f32.mrb[0].mxu0
      %v1441 = vadd.f32 %v1101, %v1440
      %v1442 = vpop.f32.mrb[0].mxu0
      %v1443 = vpop.f32.mrb[0].mxu0
      %v1444 = vadd.f32 %v1104, %v1443
      %v1445 = vpop.f32.mrb[0].mxu0
      %1446 = vmatprep.mubr.bf16.mxu0 0
      %1447 = vmatmul.mubr.bf16.gmra.mrb[0].mxu0 %v1349
      %v1448 = vpop.f32.mrb[0].mxu0
      %v1449 = vadd.f32 %v1109, %v1448
      %v1450 = vpop.f32.mrb[0].mxu0
      %v1451 = vpop.f32.mrb[0].mxu0
      %v1452 = vadd.f32 %v1112, %v1451
      %v1453 = vpop.f32.mrb[0].mxu0
      %1454 = vdwg.mxu0
      %v1471 = vunpack.c.l.b16 %v1116
      %v1472 = vunpack.c.l.b16 %v1117
      %v1473 = vunpack.c.l.b16 %v1118
      %v1474 = vunpack.c.l.b16 %v1119
      %v1475 = vunpack.c.l.b16 %v1120
      %v1476 = vunpack.c.l.b16 %v1121
      %v1477 = vunpack.c.l.b16 %v1122
      %v1478 = vunpack.c.l.b16 %v1123
      %v1479 = vunpack.c.l.b16 %v1124
      %v1480 = vunpack.c.l.b16 %v1125
      %v1481 = vunpack.c.l.b16 %v1126
      %v1482 = vunpack.c.l.b16 %v1127
      %v1483 = vunpack.c.l.b16 %v1128
      %v1484 = vunpack.c.l.b16 %v1129
      %v1485 = vunpack.c.l.b16 %v1130
      %v1486 = vunpack.c.l.b16 %v1131
      %v1487 = vpack.c.b16 %v1472, %v1471
      %v1488 = vpack.c.b16 %v1474, %v1473
      %v1489 = vpack.c.b16 %v1476, %v1475
      %v1490 = vpack.c.b16 %v1478, %v1477
      %v1491 = vpack.c.b16 %v1480, %v1479
      %v1492 = vpack.c.b16 %v1482, %v1481
      %v1493 = vpack.c.b16 %v1484, %v1483
      %v1494 = vpack.c.b16 %v1486, %v1485
      %1503 = vmatprep.subr.bf16.mxu0 0
      %1504 = vmatpush1.bf16.msra.mxu0 %v891
      %1505 = vmatprep.subr.bf16.mxu0 0
      %1506 = vmatpush1.bf16.msra.mxu0 %v895
      %1507 = vmatprep.subr.bf16.mxu0 0
      %1508 = vmatpush1.bf16.msra.mxu0 %v899
      %1509 = vmatprep.subr.bf16.mxu0 0
      %1510 = vmatpush1.bf16.msra.mxu0 %v903
      %1511 = vmatprep.subr.bf16.mxu0 0
      %1512 = vmatpush1.bf16.msra.mxu0 %v907
      %1513 = vmatprep.subr.bf16.mxu0 0
      %1514 = vmatpush1.bf16.msra.mxu0 %v911
      %1515 = vmatprep.subr.bf16.mxu0 0
      %1516 = vmatpush1.bf16.msra.mxu0 %v915
      %1517 = vmatprep.subr.bf16.mxu0 0
      %1518 = vmatpush1.bf16.msra.mxu0 %v919
      %1519 = vmatprep.subr.bf16.mxu0 0
      %1520 = vmatpush1.bf16.msra.mxu0 0
      %1521 = vmatprep.subr.bf16.mxu0 0
      %1522 = vmatpush1.bf16.msra.mxu0 0
      %1523 = vmatprep.subr.bf16.mxu0 0
      %1524 = vmatpush1.bf16.msra.mxu0 0
      %1525 = vmatprep.subr.bf16.mxu0 0
      %1526 = vmatpush1.bf16.msra.mxu0 0
      %1527 = vmatprep.subr.bf16.mxu0 0
      %1528 = vmatpush1.bf16.msra.mxu0 0
      %1529 = vmatprep.subr.bf16.mxu0 0
      %1530 = vmatpush1.bf16.msra.mxu0 0
      %1531 = vmatprep.subr.bf16.mxu0 0
      %1532 = vmatpush1.bf16.msra.mxu0 0
      %1533 = vmatprep.subr.bf16.mxu0 0
      %1534 = vmatpush1.bf16.msra.mxu0 0
      %1535 = vmatprep.mubr.bf16.mxu0 0
      %1536 = vmatmul.mubr.bf16.gmra.mrb[0].mxu0 %v1487
      %v1537 = vpop.f32.mrb[0].mxu0
      %v1538 = vadd.f32 %v1232, %v1537
      %v1539 = vpop.f32.mrb[0].mxu0
      %v1540 = vpop.f32.mrb[0].mxu0
      %v1541 = vadd.f32 %v1235, %v1540
      %v1542 = vpop.f32.mrb[0].mxu0
      %1543 = vmatprep.mubr.bf16.mxu0 0
      %1544 = vmatmul.mubr.bf16.gmra.mrb[0].mxu0 %v1488
      %v1545 = vpop.f32.mrb[0].mxu0
      %v1546 = vadd.f32 %v1240, %v1545
      %v1547 = vpop.f32.mrb[0].mxu0
      %v1548 = vpop.f32.mrb[0].mxu0
      %v1549 = vadd.f32 %v1243, %v1548
      %v1550 = vpop.f32.mrb[0].mxu0
      %1551 = vmatprep.mubr.bf16.mxu0 0
      %1552 = vmatmul.mubr.bf16.gmra.mrb[0].mxu0 %v1489
      %v1553 = vpop.f32.mrb[0].mxu0
      %v1554 = vadd.f32 %v1248, %v1553
      %v1555 = vpop.f32.mrb[0].mxu0
      %v1556 = vpop.f32.mrb[0].mxu0
      %v1557 = vadd.f32 %v1251, %v1556
      %v1558 = vpop.f32.mrb[0].mxu0
      %1559 = vmatprep.mubr.bf16.mxu0 0
      %1560 = vmatmul.mubr.bf16.gmra.mrb[0].mxu0 %v1490
      %v1561 = vpop.f32.mrb[0].mxu0
      %v1562 = vadd.f32 %v1256, %v1561
      %v1563 = vpop.f32.mrb[0].mxu0
      %v1564 = vpop.f32.mrb[0].mxu0
      %v1565 = vadd.f32 %v1259, %v1564
      %v1566 = vpop.f32.mrb[0].mxu0
      %1567 = vmatprep.mubr.bf16.mxu0 0
      %1568 = vmatmul.mubr.bf16.gmra.mrb[0].mxu0 %v1491
      %v1569 = vpop.f32.mrb[0].mxu0
      %v1570 = vadd.f32 %v1264, %v1569
      %v1571 = vpop.f32.mrb[0].mxu0
      %v1572 = vpop.f32.mrb[0].mxu0
      %v1573 = vadd.f32 %v1267, %v1572
      %v1574 = vpop.f32.mrb[0].mxu0
      %1575 = vmatprep.mubr.bf16.mxu0 0
      %1576 = vmatmul.mubr.bf16.gmra.mrb[0].mxu0 %v1492
      %v1577 = vpop.f32.mrb[0].mxu0
      %v1578 = vadd.f32 %v1272, %v1577
      %v1579 = vpop.f32.mrb[0].mxu0
      %v1580 = vpop.f32.mrb[0].mxu0
      %v1581 = vadd.f32 %v1275, %v1580
      %v1582 = vpop.f32.mrb[0].mxu0
      %1583 = vmatprep.mubr.bf16.mxu0 0
      %1584 = vmatmul.mubr.bf16.gmra.mrb[0].mxu0 %v1493
      %v1585 = vpop.f32.mrb[0].mxu0
      %v1586 = vadd.f32 %v1280, %v1585
      %v1587 = vpop.f32.mrb[0].mxu0
      %v1588 = vpop.f32.mrb[0].mxu0
      %v1589 = vadd.f32 %v1283, %v1588
      %v1590 = vpop.f32.mrb[0].mxu0
      %1591 = vmatprep.mubr.bf16.mxu0 0
      %1592 = vmatmul.mubr.bf16.gmra.mrb[0].mxu0 %v1494
      %v1593 = vpop.f32.mrb[0].mxu0
      %v1594 = vadd.f32 %v1288, %v1593
      %v1595 = vpop.f32.mrb[0].mxu0
      %v1596 = vpop.f32.mrb[0].mxu0
      %v1597 = vadd.f32 %v1291, %v1596
      %v1598 = vpop.f32.mrb[0].mxu0
      %1599 = vdwg.mxu0
      %v1600 = vadd.f32 %v1393, %v1538
      %v1601 = vadd.f32 %v1396, %v1541
      %v1602 = vadd.f32 %v1401, %v1546
      %v1603 = vadd.f32 %v1404, %v1549
      %v1604 = vadd.f32 %v1409, %v1554
      %v1605 = vadd.f32 %v1412, %v1557
      %v1606 = vadd.f32 %v1417, %v1562
      %v1607 = vadd.f32 %v1420, %v1565
      %v1608 = vadd.f32 %v1425, %v1570
      %v1609 = vadd.f32 %v1428, %v1573
      %v1610 = vadd.f32 %v1433, %v1578
      %v1611 = vadd.f32 %v1436, %v1581
      %v1612 = vadd.f32 %v1441, %v1586
      %v1613 = vadd.f32 %v1444, %v1589
      %v1614 = vadd.f32 %v1449, %v1594
      %v1615 = vadd.f32 %v1452, %v1597
      %v1616 = vadd.f32 %v1294, %v1600
      %v1617 = vadd.f32 %v1295, %v1601
      %v1618 = vadd.f32 %v1296, %v1602
      %v1619 = vadd.f32 %v1297, %v1603
      %v1620 = vadd.f32 %v1298, %v1604
      %v1621 = vadd.f32 %v1299, %v1605
      %v1622 = vadd.f32 %v1300, %v1606
      %v1623 = vadd.f32 %v1301, %v1607
      %v1624 = vadd.f32 %v1302, %v1608
      %v1625 = vadd.f32 %v1303, %v1609
      %v1626 = vadd.f32 %v1304, %v1610
      %v1627 = vadd.f32 %v1305, %v1611
      %v1628 = vadd.f32 %v1306, %v1612
      %v1629 = vadd.f32 %v1307, %v1613
      %v1630 = vadd.f32 %v1308, %v1614
      %v1631 = vadd.f32 %v1309, %v1615
      %v1632 = vmax.f32 %v1616, 0.0
      %v1633 = vmax.f32 %v1617, 0.0
      %v1634 = vmax.f32 %v1618, 0.0
      %v1635 = vmax.f32 %v1619, 0.0
      %v1636 = vmax.f32 %v1620, 0.0
      %v1637 = vmax.f32 %v1621, 0.0
      %v1638 = vmax.f32 %v1622, 0.0
      %v1639 = vmax.f32 %v1623, 0.0
      %v1640 = vmax.f32 %v1624, 0.0
      %v1641 = vmax.f32 %v1625, 0.0
      %v1642 = vmax.f32 %v1626, 0.0
      %v1643 = vmax.f32 %v1627, 0.0
      %v1644 = vmax.f32 %v1628, 0.0
      %v1645 = vmax.f32 %v1629, 0.0
      %v1646 = vmax.f32 %v1630, 0.0
      %v1647 = vmax.f32 %v1631, 0.0
      %1648 = vxpose.xlu0.b32.start [1/16] %v1632, 128
      %1649 = vxpose.xlu0.b32.cont [2/16] %v1633, 128
      %1650 = vxpose.xlu0.b32.cont [3/16] %v1634, 128
      %1651 = vxpose.xlu0.b32.cont [4/16] %v1635, 128
      %1652 = vxpose.xlu0.b32.cont [5/16] %v1636, 128
      %1653 = vxpose.xlu0.b32.cont [6/16] %v1637, 128
      %1654 = vxpose.xlu0.b32.cont [7/16] %v1638, 128
      %1655 = vxpose.xlu0.b32.cont [8/16] %v1639, 128
      %1656 = vxpose.xlu0.b32.cont [9/16] %v1640, 128
      %1657 = vxpose.xlu0.b32.cont [10/16] %v1641, 128
      %1658 = vxpose.xlu0.b32.cont [11/16] %v1642, 128
      %1659 = vxpose.xlu0.b32.cont [12/16] %v1643, 128
      %1660 = vxpose.xlu0.b32.cont [13/16] %v1644, 128
      %1661 = vxpose.xlu0.b32.cont [14/16] %v1645, 128
      %1662 = vxpose.xlu0.b32.cont [15/16] %v1646, 128
      %1663 = vxpose.xlu0.b32.end [16/16] %v1647, 128
      %v1664 = vpop.trf.xlu0
      %v1665 = vpop.trf.xlu0
      %v1666 = vpop.trf.xlu0
      %v1667 = vpop.trf.xlu0
      %v1668 = vpop.trf.xlu0
      %v1669 = vpop.trf.xlu0
      %v1670 = vpop.trf.xlu0
      %v1671 = vpop.trf.xlu0
      %v1672 = vpop.trf.xlu0
      %v1673 = vpop.trf.xlu0
      %v1674 = vpop.trf.xlu0
      %v1675 = vpop.trf.xlu0
      %v1676 = vpop.trf.xlu0
      %v1677 = vpop.trf.xlu0
      %v1678 = vpop.trf.xlu0
      %v1679 = vpop.trf.xlu0
      %1680 = vst [vmem:[%s249] sm:$0xff] %v1664
      %p1681 = scmp.lt.s32.totalorder %s17, 1
      %s1682 = scalar_select %p1681, %s17, 1
      %s1683 = smul.addr %s1682, 8
      %s1684 = scalar_lea.vmem %s6, %s1683
      // Predicated region
      $region45: #{skip_connection_forward.1} parent=43 // pred_check
        %p1685 = pneg %p166
      $region46: #{skip_connection_forward.1} parent=43 // pred_check_branch
        %1687 = sbr.rel (%p1685) target = $region48
      $region47: #{skip_connection_forward.1} parent=43 // pred_region
        _
      $region48: #{skip_connection_forward.1} parent=43 // pred_fallthru
        _
    $region44: #{skip_connection_forward.1} parent=5 // pred_fallthru
      _
    %p1688 = scmp.le.s32.totalorder 2, %s12
    // Predicated region
    $region49: #{skip_connection_forward.1} parent=5 // pred_check
      %p1689 = pneg %p1688
    $region50: #{skip_connection_forward.1} parent=5 // pred_check_branch
      %1691 = sbr.rel (%p1689) target = $region52
    $region51: #{skip_connection_forward.1} parent=5 // pred_region
      %s1692 = ssub.s32 %s12, 2
      // Predicated region
      $region53: #{skip_connection_forward.1} parent=51 // pred_check
        %p1693 = pneg %p172
      $region54: #{skip_connection_forward.1} parent=51 // pred_check_branch
        %1695 = sbr.rel (%p1693) target = $region56
      $region55: #{skip_connection_forward.1} parent=51 // pred_region
        %p1696 = scmp.lt.s32.totalorder %s18, 1
        %s1697 = scalar_select %p1696, %s18, 1
        %s1698 = smul.addr %s1697, 8
        %s1699 = scalar_lea.vmem %s6, %s1698
      $region56: #{skip_connection_forward.1} parent=51 // pred_fallthru
        _
    $region52: #{skip_connection_forward.1} parent=5 // pred_fallthru
      _
  $region6: #{skip_connection_forward.1} parent=0 // loop_footer
    %s16 = sadd.s32 1, %s12
  $region7: #{skip_connection_forward.1} parent=0 // loop_footer_branch
    %11 = sbr.rel target = $region3
  $region8: #{skip_connection_forward.1} parent=0 // loop_exit
    _

</llo_original>
